<compile_context>
chip_gen: v5e
topology: v5e:2x2
jax: 0.10.0
libtpu: 0.0.40
codegen_flags: <defaults>
</compile_context>

<pallas_src>
import jax
import jax.numpy as jnp
from jax import lax
from jax.experimental import pallas as pl
from jax.experimental.pallas import tpu as pltpu

F32 = jnp.float32
VMEM = pltpu.MemorySpace.VMEM
SMEM = pltpu.MemorySpace.SMEM


# ---------------------------- fused kernel ----------------------------

def encoder_fused_kernel(
        x_ref, ea_ref, gat_ref, agg_ref, mask_ref, sel_ref,
        lin0_w_ref, lin0_b_ref,
        nn1_w_ref, nn1_b_ref, nn2_w_ref, nn2_b_ref, conv_b_ref,
        gru_wih_ref, gru_whh_ref, gru_bih_ref, gru_bhh_ref,
        s2s_w_ref, s2s_b_ref,
        mix_ref,
        o_ref):
    dim = lin0_w_ref.shape[1]
    nb = mask_ref.shape[0]
    d2 = dim * dim

    def mm(a, b):
        return jnp.dot(a, b, preferred_element_type=F32)

    # ---- lin0 + ReLU ----
    h_n0 = jnp.maximum(mm(x_ref[...], lin0_w_ref[...]) + lin0_b_ref[...], 0.0)

    # ---- edge network nn(edge_attr): Linear(5,128)->ReLU->Linear(128,dim*dim)
    # edge_attr is constant across the 3 MP steps -> hoisted out of the loop.
    h1 = jnp.maximum(mm(ea_ref[...], nn1_w_ref[...]) + nn1_b_ref[...], 0.0)
    we = mm(h1, nn2_w_ref[...]) + nn2_b_ref[...]            # [E, dim*dim]

    # NNConv contraction constants:  msg = ((xj @ REP) * we) @ SEL
    #   rep[d, j] = (j // dim == d)   generated in-kernel (iota range compare)
    #   sel[j, k] = (j %  dim == k)   shipped bf16, cast once
    rows = lax.broadcasted_iota(jnp.int32, (dim, d2), 0) * dim
    cols = lax.broadcasted_iota(jnp.int32, (dim, d2), 1)
    rep = jnp.logical_and(cols >= rows, cols < rows + dim).astype(F32)
    sel = sel_ref[...].astype(F32)                          # [dim*dim, dim]

    out = h_n0
    h = h_n0                      # h = out.unsqueeze(0): initial GRU hidden
    global_node = jnp.zeros_like(h_n0)

    # ---- 3 message-passing steps (fixed trip count, VMEM-resident state) ----
    for step in range(3):
        # NNConv(dim, dim, aggr='mean', root_weight=False):
        #   msg[e,k] = sum_d x_src[e,d] * we[e, d*dim+k]
        xj = mm(gat_ref[...], out)                          # [E, dim] gather x_j
        msg = mm(mm(xj, rep) * we, sel)                     # [E, dim]
        m = jnp.maximum(mm(agg_ref[...], msg) + conv_b_ref[...], 0.0)  # mean aggr
        # feature_conv 1x1 Conv2d over the (out, m) channel stack -> fused FMA
        m = mix_ref[0] * out + mix_ref[1] * m + mix_ref[2]
        # fused GRU cell (PyTorch gate order r, z, n): 2 matmuls per step
        gi = mm(m, gru_wih_ref[...]) + gru_bih_ref[...]     # [N, 3*dim]
        gh = mm(h, gru_whh_ref[...]) + gru_bhh_ref[...]     # [N, 3*dim]
        r_g = jax.nn.sigmoid(gi[:, 0:dim] + gh[:, 0:dim])
        z_g = jax.nn.sigmoid(gi[:, dim:2 * dim] + gh[:, dim:2 * dim])
        n_g = jnp.tanh(gi[:, 2 * dim:3 * dim] + r_g * gh[:, 2 * dim:3 * dim])
        out = (1.0 - z_g) * n_g + z_g * h
        h = out
        # layer_conv 1x1 Conv2d: channel = MP-step index -> accumulated FMA
        global_node = global_node + mix_ref[3 + step] * out
    global_node = global_node + mix_ref[6]                  # [N, dim]

    # ---- Set2Set(dim, processing_steps=3) ----
    # Hoist the transpose of global_node out of the loop: one identity NT-dot
    # on the MXU gives gnT = global_node^T, reused by all 3 attention steps.
    eye = (lax.broadcasted_iota(jnp.int32, (dim, dim), 0)
           == lax.broadcasted_iota(jnp.int32, (dim, dim), 1)).astype(F32)
    gnT = lax.dot_general(eye, global_node, (((1,), (1,)), ((), ())),
                          preferred_element_type=F32)       # [dim, N]

    mask = mask_ref[...]                                    # [B, N] membership
    qr = jnp.zeros((nb, 2 * dim), F32)                      # q_star = [q | r]
    cc = jnp.zeros((nb, dim), F32)                          # LSTM cell state
    for _ in range(3):
        # fused LSTM step (gate order i, f, g, o): 1 matmul per step
        g = mm(qr, s2s_w_ref[...]) + s2s_b_ref[...]         # [B, 4*dim]
        i_g = jax.nn.sigmoid(g[:, 0:dim])
        f_g = jax.nn.sigmoid(g[:, dim:2 * dim])
        g_g = jnp.tanh(g[:, 2 * dim:3 * dim])
        o_g = jax.nn.sigmoid(g[:, 3 * dim:4 * dim])
        cc = f_g * cc + i_g * g_g
        q = o_g * jnp.tanh(cc)                              # LSTM output == hidden
        # attention logits e[b,n] = <q[b], global_node[n]>
        e = mm(q, gnT)                                      # [B, N]
        masked = jnp.where(mask > 0.5, e, -1e30)
        gmax = jnp.max(masked, axis=1, keepdims=True)
        alpha = jnp.exp(masked - gmax) * mask
        denom = jnp.maximum(jnp.sum(alpha, axis=1, keepdims=True), 1e-20)
        a = alpha / denom                                   # exact divide
        r = mm(a, global_node)                              # [B, dim] readout
        qr = jnp.concatenate([q, r], axis=-1)               # next q_star

    o_ref[...] = qr                                         # single lane-dense store


# ---------------------------- params & wrapper ----------------------------

def init_params(key, num_features, dim):
    ks = jax.random.split(key, 12)

    def lin(k, i, o, s=0.1):
        kw, kb = jax.random.split(k)
        return (s * jax.random.normal(kw, (i, o), F32),
                s * jax.random.normal(kb, (1, o), F32))

    p = {}
    p['lin0_w'], p['lin0_b'] = lin(ks[0], num_features, dim)          # lin0
    p['nn1_w'], p['nn1_b'] = lin(ks[1], 5, 128)                       # edge nn Linear(5,128)
    p['nn2_w'], p['nn2_b'] = lin(ks[2], 128, dim * dim)               # edge nn Linear(128,dim*dim)
    p['conv_b'] = 0.1 * jax.random.normal(ks[3], (1, dim), F32)       # NNConv bias
    p['gru_wih'], p['gru_bih'] = lin(ks[4], dim, 3 * dim)             # GRU(dim, dim), gates (r,z,n)
    p['gru_whh'], p['gru_bhh'] = lin(ks[5], dim, 3 * dim)
    p['fc_w'] = 0.5 * jax.random.normal(ks[6], (2, 1, 1), F32)        # feature_conv Conv2d(2,1,1x1)
    p['fc_b'] = 0.1 * jax.random.normal(ks[7], (1, 1), F32)
    p['lc_w'] = 0.5 * jax.random.normal(ks[8], (3, 1, 1), F32)        # layer_conv Conv2d(3,1,1x1)
    p['lc_b'] = 0.1 * jax.random.normal(ks[9], (1, 1), F32)
    p['s2s_wih'], p['s2s_bih'] = lin(ks[10], 2 * dim, 4 * dim)        # Set2Set LSTM(2*dim, dim), (i,f,g,o)
    p['s2s_whh'], p['s2s_bhh'] = lin(ks[11], dim, 4 * dim)
    return p


def encoder_forward_eval(x, edge_attr, gat, agg, mask, params, dim):
    """eval=True branch of Encoder.forward -> global_graph [B, 2*dim]."""
    B = mask.shape[0]

    # Set2Set LSTM fusion: recurrent hidden == previous q (rows 0:dim of
    # q_star), so fold W_hh into the q-rows of W_ih -> one [2*dim, 4*dim]
    # fused weight and one fused bias.
    s2s_w = params['s2s_wih'].at[0:dim, :].add(params['s2s_whh'])
    s2s_b = params['s2s_bih'] + params['s2s_bhh']

    # SEL contraction constant, shipped bf16 (0/1 exact), cast once in-kernel.
    sel = jnp.tile(jnp.eye(dim, dtype=F32), (dim, 1)).astype(jnp.bfloat16)

    # 1x1 conv channel-mix scalars -> SMEM
    # layout: [fc_out, fc_m, fc_b, lc_0, lc_1, lc_2, lc_b, pad]
    mix = jnp.concatenate([
        params['fc_w'].reshape(-1), params['fc_b'].reshape(-1),
        params['lc_w'].reshape(-1), params['lc_b'].reshape(-1),
        jnp.zeros((1,), F32)]).astype(F32)                   # [8]

    args = (x, edge_attr, gat, agg, mask, sel,
            params['lin0_w'], params['lin0_b'],
            params['nn1_w'], params['nn1_b'], params['nn2_w'], params['nn2_b'],
            params['conv_b'],
            params['gru_wih'], params['gru_whh'],
            params['gru_bih'], params['gru_bhh'],
            s2s_w, s2s_b,
            mix)

    in_specs = ([pl.BlockSpec(memory_space=VMEM)] * (len(args) - 1)
                + [pl.BlockSpec(memory_space=SMEM)])

    return pl.pallas_call(
        encoder_fused_kernel,
        out_shape=jax.ShapeDtypeStruct((B, 2 * dim), F32),
        in_specs=in_specs,
        out_specs=pl.BlockSpec(memory_space=VMEM),
        compiler_params=pltpu.CompilerParams(
            vmem_limit_bytes=32 * 1024 * 1024),
    )(*args)


# ---------------------------- example / smoke test ----------------------------

if __name__ == "__main__":
    key = jax.random.PRNGKey(0)
    num_features, dim, times, mode = 4, 16, 1, 'MH'   # Encoder(num_features, dim, times, mode)
    n_per, n_graphs = 6, 2
    N = n_per * n_graphs

    k_x, k_ea, k_p = jax.random.split(key, 3)
    x = jax.random.normal(k_x, (N, num_features), F32)
    batch = jnp.repeat(jnp.arange(n_graphs, dtype=jnp.int32), n_per)

    # deterministic bidirectional ring edges inside each graph
    src, dst = [], []
    for g in range(n_graphs):
        base = g * n_per
        for i in range(n_per):
            j = (i + 1) % n_per
            src += [base + i, base + j]
            dst += [base + j, base + i]
    src = jnp.array(src, jnp.int32)
    dst = jnp.array(dst, jnp.int32)
    E = int(src.shape[0])
    edge_attr = jax.random.uniform(k_ea, (E, 5), F32)

    # glue: dense one-hot gather / mean-scatter / graph-membership matrices
    gat = jax.nn.one_hot(src, N, dtype=F32)                                     # [E, N]
    deg = jnp.zeros((N,), F32).at[dst].add(1.0)
    agg = jax.nn.one_hot(dst, N, dtype=F32).T / jnp.maximum(deg, 1.0)[:, None]  # [N, E]
    mask = jax.nn.one_hot(batch, n_graphs, dtype=F32).T                         # [B, N]

    params = init_params(k_p, num_features, dim)
    out = encoder_forward_eval(x, edge_attr, gat, agg, mask, params, dim)
    out = jax.block_until_ready(out)
    assert out.shape == (n_graphs, 2 * dim)
    assert bool(jnp.all(jnp.isfinite(out)))
    print("KERNEL_OK")
</pallas_src>

<mosaic_0001>
module attributes {stable_mosaic.version = 11 : i64} {
  func.func @encoder_fused_kernel(%arg0: memref<12x4xf32, #tpu.memory_space<vmem>>, %arg1: memref<24x5xf32, #tpu.memory_space<vmem>>, %arg2: memref<24x12xf32, #tpu.memory_space<vmem>>, %arg3: memref<12x24xf32, #tpu.memory_space<vmem>>, %arg4: memref<2x12xf32, #tpu.memory_space<vmem>>, %arg5: memref<256x16xbf16, #tpu.memory_space<vmem>>, %arg6: memref<4x16xf32, #tpu.memory_space<vmem>>, %arg7: memref<1x16xf32, #tpu.memory_space<vmem>>, %arg8: memref<5x128xf32, #tpu.memory_space<vmem>>, %arg9: memref<1x128xf32, #tpu.memory_space<vmem>>, %arg10: memref<128x256xf32, #tpu.memory_space<vmem>>, %arg11: memref<1x256xf32, #tpu.memory_space<vmem>>, %arg12: memref<1x16xf32, #tpu.memory_space<vmem>>, %arg13: memref<16x48xf32, #tpu.memory_space<vmem>>, %arg14: memref<16x48xf32, #tpu.memory_space<vmem>>, %arg15: memref<1x48xf32, #tpu.memory_space<vmem>>, %arg16: memref<1x48xf32, #tpu.memory_space<vmem>>, %arg17: memref<32x64xf32, #tpu.memory_space<vmem>>, %arg18: memref<1x64xf32, #tpu.memory_space<vmem>>, %arg19: memref<8xf32, #tpu.memory_space<smem>>, %arg20: memref<2x32xf32, #tpu.memory_space<vmem>>) attributes {dimension_semantics = [], scalar_prefetch = 0 : i64, scratch_operands = 0 : i64, tpu.core_type = #tpu.core_type<tc>} {
    %c0 = arith.constant 0 : index
    %c0_0 = arith.constant 0 : index
    %0 = vector.load %arg0[%c0, %c0_0] : memref<12x4xf32, #tpu.memory_space<vmem>>, vector<12x4xf32>
    %c0_1 = arith.constant 0 : index
    %c0_2 = arith.constant 0 : index
    %1 = vector.load %arg6[%c0_1, %c0_2] : memref<4x16xf32, #tpu.memory_space<vmem>>, vector<4x16xf32>
    %cst = arith.constant dense<0.000000e+00> : vector<12x16xf32>
    %2 = tpu.matmul %0, %1, %cst {dimension_numbers = #tpu.dot_dimension_numbers<[1], [0], [0], [1], [0, 0, 1, 1], [], []>} : vector<12x4xf32>, vector<4x16xf32>, vector<12x16xf32> -> vector<12x16xf32>
    %c0_3 = arith.constant 0 : index
    %c0_4 = arith.constant 0 : index
    %3 = vector.load %arg7[%c0_3, %c0_4] : memref<1x16xf32, #tpu.memory_space<vmem>>, vector<1x16xf32>
    %4 = vector.broadcast %3 : vector<1x16xf32> to vector<12x16xf32>
    %5 = arith.addf %2, %4 : vector<12x16xf32>
    %cst_5 = arith.constant 0.000000e+00 : f32
    %6 = vector.broadcast %cst_5 : f32 to vector<12x16xf32>
    %7 = arith.maximumf %5, %6 : vector<12x16xf32>
    %c0_6 = arith.constant 0 : index
    %c0_7 = arith.constant 0 : index
    %8 = vector.load %arg1[%c0_6, %c0_7] : memref<24x5xf32, #tpu.memory_space<vmem>>, vector<24x5xf32>
    %c0_8 = arith.constant 0 : index
    %c0_9 = arith.constant 0 : index
    %9 = vector.load %arg8[%c0_8, %c0_9] : memref<5x128xf32, #tpu.memory_space<vmem>>, vector<5x128xf32>
    %cst_10 = arith.constant dense<0.000000e+00> : vector<24x128xf32>
    %10 = tpu.matmul %8, %9, %cst_10 {dimension_numbers = #tpu.dot_dimension_numbers<[1], [0], [0], [1], [0, 0, 1, 1], [], []>} : vector<24x5xf32>, vector<5x128xf32>, vector<24x128xf32> -> vector<24x128xf32>
    %c0_11 = arith.constant 0 : index
    %c0_12 = arith.constant 0 : index
    %11 = vector.load %arg9[%c0_11, %c0_12] : memref<1x128xf32, #tpu.memory_space<vmem>>, vector<1x128xf32>
    %12 = vector.broadcast %11 : vector<1x128xf32> to vector<24x128xf32>
    %13 = arith.addf %10, %12 : vector<24x128xf32>
    %cst_13 = arith.constant 0.000000e+00 : f32
    %14 = vector.broadcast %cst_13 : f32 to vector<24x128xf32>
    %15 = arith.maximumf %13, %14 : vector<24x128xf32>
    %c0_14 = arith.constant 0 : index
    %c0_15 = arith.constant 0 : index
    %16 = vector.load %arg10[%c0_14, %c0_15] : memref<128x256xf32, #tpu.memory_space<vmem>>, vector<128x256xf32>
    %cst_16 = arith.constant dense<0.000000e+00> : vector<24x256xf32>
    %17 = tpu.matmul %15, %16, %cst_16 {dimension_numbers = #tpu.dot_dimension_numbers<[1], [0], [0], [1], [0, 0, 1, 1], [], []>} : vector<24x128xf32>, vector<128x256xf32>, vector<24x256xf32> -> vector<24x256xf32>
    %c0_17 = arith.constant 0 : index
    %c0_18 = arith.constant 0 : index
    %18 = vector.load %arg11[%c0_17, %c0_18] : memref<1x256xf32, #tpu.memory_space<vmem>>, vector<1x256xf32>
    %19 = vector.broadcast %18 : vector<1x256xf32> to vector<24x256xf32>
    %20 = arith.addf %17, %19 : vector<24x256xf32>
    %21 = tpu.iota {dimensions = array<i32: 0>} : vector<16x256xi32>
    %c16_i32 = arith.constant 16 : i32
    %22 = vector.broadcast %c16_i32 : i32 to vector<16x256xi32>
    %23 = arith.muli %21, %22 : vector<16x256xi32>
    %24 = tpu.iota {dimensions = array<i32: 1>} : vector<16x256xi32>
    %25 = arith.cmpi sge, %24, %23 : vector<16x256xi32>
    %c16_i32_19 = arith.constant 16 : i32
    %26 = vector.broadcast %c16_i32_19 : i32 to vector<16x256xi32>
    %27 = arith.addi %23, %26 : vector<16x256xi32>
    %28 = arith.cmpi slt, %24, %27 : vector<16x256xi32>
    %29 = arith.andi %25, %28 : vector<16x256xi1>
    %30 = arith.extui %29 : vector<16x256xi1> to vector<16x256xi32>
    %31 = arith.sitofp %30 : vector<16x256xi32> to vector<16x256xf32>
    %c0_20 = arith.constant 0 : index
    %c0_21 = arith.constant 0 : index
    %32 = vector.load %arg5[%c0_20, %c0_21] : memref<256x16xbf16, #tpu.memory_space<vmem>>, vector<256x16xbf16>
    %33 = arith.extf %32 : vector<256x16xbf16> to vector<256x16xf32>
    %cst_22 = arith.constant 0.000000e+00 : f32
    %34 = vector.broadcast %cst_22 : f32 to vector<12x16xf32>
    %c0_23 = arith.constant 0 : index
    %c0_24 = arith.constant 0 : index
    %35 = vector.load %arg2[%c0_23, %c0_24] : memref<24x12xf32, #tpu.memory_space<vmem>>, vector<24x12xf32>
    %cst_25 = arith.constant dense<0.000000e+00> : vector<24x16xf32>
    %36 = tpu.matmul %35, %7, %cst_25 {dimension_numbers = #tpu.dot_dimension_numbers<[1], [0], [0], [1], [0, 0, 1, 1], [], []>} : vector<24x12xf32>, vector<12x16xf32>, vector<24x16xf32> -> vector<24x16xf32>
    %cst_26 = arith.constant dense<0.000000e+00> : vector<24x256xf32>
    %37 = tpu.matmul %36, %31, %cst_26 {dimension_numbers = #tpu.dot_dimension_numbers<[1], [0], [0], [1], [0, 0, 1, 1], [], []>} : vector<24x16xf32>, vector<16x256xf32>, vector<24x256xf32> -> vector<24x256xf32>
    %38 = arith.mulf %37, %20 : vector<24x256xf32>
    %cst_27 = arith.constant dense<0.000000e+00> : vector<24x16xf32>
    %39 = tpu.matmul %38, %33, %cst_27 {dimension_numbers = #tpu.dot_dimension_numbers<[1], [0], [0], [1], [0, 0, 1, 1], [], []>} : vector<24x256xf32>, vector<256x16xf32>, vector<24x16xf32> -> vector<24x16xf32>
    %c0_28 = arith.constant 0 : index
    %c0_29 = arith.constant 0 : index
    %40 = vector.load %arg3[%c0_28, %c0_29] : memref<12x24xf32, #tpu.memory_space<vmem>>, vector<12x24xf32>
    %cst_30 = arith.constant dense<0.000000e+00> : vector<12x16xf32>
    %41 = tpu.matmul %40, %39, %cst_30 {dimension_numbers = #tpu.dot_dimension_numbers<[1], [0], [0], [1], [0, 0, 1, 1], [], []>} : vector<12x24xf32>, vector<24x16xf32>, vector<12x16xf32> -> vector<12x16xf32>
    %c0_31 = arith.constant 0 : index
    %c0_32 = arith.constant 0 : index
    %42 = vector.load %arg12[%c0_31, %c0_32] : memref<1x16xf32, #tpu.memory_space<vmem>>, vector<1x16xf32>
    %43 = vector.broadcast %42 : vector<1x16xf32> to vector<12x16xf32>
    %44 = arith.addf %41, %43 : vector<12x16xf32>
    %cst_33 = arith.constant 0.000000e+00 : f32
    %45 = vector.broadcast %cst_33 : f32 to vector<12x16xf32>
    %46 = arith.maximumf %44, %45 : vector<12x16xf32>
    %c0_34 = arith.constant 0 : index
    %47 = memref.load %arg19[%c0_34] : memref<8xf32, #tpu.memory_space<smem>>
    %48 = vector.broadcast %47 : f32 to vector<12x16xf32>
    %49 = arith.mulf %48, %7 : vector<12x16xf32>
    %c1 = arith.constant 1 : index
    %50 = memref.load %arg19[%c1] : memref<8xf32, #tpu.memory_space<smem>>
    %51 = vector.broadcast %50 : f32 to vector<12x16xf32>
    %52 = arith.mulf %51, %46 : vector<12x16xf32>
    %53 = arith.addf %49, %52 : vector<12x16xf32>
    %c2 = arith.constant 2 : index
    %54 = memref.load %arg19[%c2] : memref<8xf32, #tpu.memory_space<smem>>
    %55 = vector.broadcast %54 : f32 to vector<12x16xf32>
    %56 = arith.addf %53, %55 : vector<12x16xf32>
    %c0_35 = arith.constant 0 : index
    %c0_36 = arith.constant 0 : index
    %57 = vector.load %arg13[%c0_35, %c0_36] : memref<16x48xf32, #tpu.memory_space<vmem>>, vector<16x48xf32>
    %cst_37 = arith.constant dense<0.000000e+00> : vector<12x48xf32>
    %58 = tpu.matmul %56, %57, %cst_37 {dimension_numbers = #tpu.dot_dimension_numbers<[1], [0], [0], [1], [0, 0, 1, 1], [], []>} : vector<12x16xf32>, vector<16x48xf32>, vector<12x48xf32> -> vector<12x48xf32>
    %c0_38 = arith.constant 0 : index
    %c0_39 = arith.constant 0 : index
    %59 = vector.load %arg15[%c0_38, %c0_39] : memref<1x48xf32, #tpu.memory_space<vmem>>, vector<1x48xf32>
    %60 = vector.broadcast %59 : vector<1x48xf32> to vector<12x48xf32>
    %61 = arith.addf %58, %60 : vector<12x48xf32>
    %c0_40 = arith.constant 0 : index
    %c0_41 = arith.constant 0 : index
    %62 = vector.load %arg14[%c0_40, %c0_41] : memref<16x48xf32, #tpu.memory_space<vmem>>, vector<16x48xf32>
    %cst_42 = arith.constant dense<0.000000e+00> : vector<12x48xf32>
    %63 = tpu.matmul %7, %62, %cst_42 {dimension_numbers = #tpu.dot_dimension_numbers<[1], [0], [0], [1], [0, 0, 1, 1], [], []>} : vector<12x16xf32>, vector<16x48xf32>, vector<12x48xf32> -> vector<12x48xf32>
    %c0_43 = arith.constant 0 : index
    %c0_44 = arith.constant 0 : index
    %64 = vector.load %arg16[%c0_43, %c0_44] : memref<1x48xf32, #tpu.memory_space<vmem>>, vector<1x48xf32>
    %65 = vector.broadcast %64 : vector<1x48xf32> to vector<12x48xf32>
    %66 = arith.addf %63, %65 : vector<12x48xf32>
    %67 = vector.extract_strided_slice %61 {offsets = [0, 0], sizes = [12, 16], strides = [1, 1]} : vector<12x48xf32> to vector<12x16xf32>
    %68 = vector.extract_strided_slice %66 {offsets = [0, 0], sizes = [12, 16], strides = [1, 1]} : vector<12x48xf32> to vector<12x16xf32>
    %69 = arith.addf %67, %68 : vector<12x16xf32>
    %70 = arith.negf %69 : vector<12x16xf32>
    %71 = math.exp %70 : vector<12x16xf32>
    %cst_45 = arith.constant 1.000000e+00 : f32
    %72 = vector.broadcast %cst_45 : f32 to vector<12x16xf32>
    %73 = arith.addf %72, %71 : vector<12x16xf32>
    %74 = arith.divf %72, %73 : vector<12x16xf32>
    %75 = vector.extract_strided_slice %61 {offsets = [0, 16], sizes = [12, 16], strides = [1, 1]} : vector<12x48xf32> to vector<12x16xf32>
    %76 = vector.extract_strided_slice %66 {offsets = [0, 16], sizes = [12, 16], strides = [1, 1]} : vector<12x48xf32> to vector<12x16xf32>
    %77 = arith.addf %75, %76 : vector<12x16xf32>
    %78 = arith.negf %77 : vector<12x16xf32>
    %79 = math.exp %78 : vector<12x16xf32>
    %cst_46 = arith.constant 1.000000e+00 : f32
    %80 = vector.broadcast %cst_46 : f32 to vector<12x16xf32>
    %81 = arith.addf %80, %79 : vector<12x16xf32>
    %82 = arith.divf %80, %81 : vector<12x16xf32>
    %83 = vector.extract_strided_slice %61 {offsets = [0, 32], sizes = [12, 16], strides = [1, 1]} : vector<12x48xf32> to vector<12x16xf32>
    %84 = vector.extract_strided_slice %66 {offsets = [0, 32], sizes = [12, 16], strides = [1, 1]} : vector<12x48xf32> to vector<12x16xf32>
    %85 = arith.mulf %74, %84 : vector<12x16xf32>
    %86 = arith.addf %83, %85 : vector<12x16xf32>
    %87 = math.tanh %86 : vector<12x16xf32>
    %cst_47 = arith.constant 1.000000e+00 : f32
    %88 = vector.broadcast %cst_47 : f32 to vector<12x16xf32>
    %89 = arith.subf %88, %82 : vector<12x16xf32>
    %90 = arith.mulf %89, %87 : vector<12x16xf32>
    %91 = arith.mulf %82, %7 : vector<12x16xf32>
    %92 = arith.addf %90, %91 : vector<12x16xf32>
    %c3 = arith.constant 3 : index
    %93 = memref.load %arg19[%c3] : memref<8xf32, #tpu.memory_space<smem>>
    %94 = vector.broadcast %93 : f32 to vector<12x16xf32>
    %95 = arith.mulf %94, %92 : vector<12x16xf32>
    %96 = arith.addf %34, %95 : vector<12x16xf32>
    %c0_48 = arith.constant 0 : index
    %c0_49 = arith.constant 0 : index
    %97 = vector.load %arg2[%c0_48, %c0_49] : memref<24x12xf32, #tpu.memory_space<vmem>>, vector<24x12xf32>
    %cst_50 = arith.constant dense<0.000000e+00> : vector<24x16xf32>
    %98 = tpu.matmul %97, %92, %cst_50 {dimension_numbers = #tpu.dot_dimension_numbers<[1], [0], [0], [1], [0, 0, 1, 1], [], []>} : vector<24x12xf32>, vector<12x16xf32>, vector<24x16xf32> -> vector<24x16xf32>
    %cst_51 = arith.constant dense<0.000000e+00> : vector<24x256xf32>
    %99 = tpu.matmul %98, %31, %cst_51 {dimension_numbers = #tpu.dot_dimension_numbers<[1], [0], [0], [1], [0, 0, 1, 1], [], []>} : vector<24x16xf32>, vector<16x256xf32>, vector<24x256xf32> -> vector<24x256xf32>
    %100 = arith.mulf %99, %20 : vector<24x256xf32>
    %cst_52 = arith.constant dense<0.000000e+00> : vector<24x16xf32>
    %101 = tpu.matmul %100, %33, %cst_52 {dimension_numbers = #tpu.dot_dimension_numbers<[1], [0], [0], [1], [0, 0, 1, 1], [], []>} : vector<24x256xf32>, vector<256x16xf32>, vector<24x16xf32> -> vector<24x16xf32>
    %c0_53 = arith.constant 0 : index
    %c0_54 = arith.constant 0 : index
    %102 = vector.load %arg3[%c0_53, %c0_54] : memref<12x24xf32, #tpu.memory_space<vmem>>, vector<12x24xf32>
    %cst_55 = arith.constant dense<0.000000e+00> : vector<12x16xf32>
    %103 = tpu.matmul %102, %101, %cst_55 {dimension_numbers = #tpu.dot_dimension_numbers<[1], [0], [0], [1], [0, 0, 1, 1], [], []>} : vector<12x24xf32>, vector<24x16xf32>, vector<12x16xf32> -> vector<12x16xf32>
    %c0_56 = arith.constant 0 : index
    %c0_57 = arith.constant 0 : index
    %104 = vector.load %arg12[%c0_56, %c0_57] : memref<1x16xf32, #tpu.memory_space<vmem>>, vector<1x16xf32>
    %105 = vector.broadcast %104 : vector<1x16xf32> to vector<12x16xf32>
    %106 = arith.addf %103, %105 : vector<12x16xf32>
    %cst_58 = arith.constant 0.000000e+00 : f32
    %107 = vector.broadcast %cst_58 : f32 to vector<12x16xf32>
    %108 = arith.maximumf %106, %107 : vector<12x16xf32>
    %c0_59 = arith.constant 0 : index
    %109 = memref.load %arg19[%c0_59] : memref<8xf32, #tpu.memory_space<smem>>
    %110 = vector.broadcast %109 : f32 to vector<12x16xf32>
    %111 = arith.mulf %110, %92 : vector<12x16xf32>
    %c1_60 = arith.constant 1 : index
    %112 = memref.load %arg19[%c1_60] : memref<8xf32, #tpu.memory_space<smem>>
    %113 = vector.broadcast %112 : f32 to vector<12x16xf32>
    %114 = arith.mulf %113, %108 : vector<12x16xf32>
    %115 = arith.addf %111, %114 : vector<12x16xf32>
    %c2_61 = arith.constant 2 : index
    %116 = memref.load %arg19[%c2_61] : memref<8xf32, #tpu.memory_space<smem>>
    %117 = vector.broadcast %116 : f32 to vector<12x16xf32>
    %118 = arith.addf %115, %117 : vector<12x16xf32>
    %c0_62 = arith.constant 0 : index
    %c0_63 = arith.constant 0 : index
    %119 = vector.load %arg13[%c0_62, %c0_63] : memref<16x48xf32, #tpu.memory_space<vmem>>, vector<16x48xf32>
    %cst_64 = arith.constant dense<0.000000e+00> : vector<12x48xf32>
    %120 = tpu.matmul %118, %119, %cst_64 {dimension_numbers = #tpu.dot_dimension_numbers<[1], [0], [0], [1], [0, 0, 1, 1], [], []>} : vector<12x16xf32>, vector<16x48xf32>, vector<12x48xf32> -> vector<12x48xf32>
    %c0_65 = arith.constant 0 : index
    %c0_66 = arith.constant 0 : index
    %121 = vector.load %arg15[%c0_65, %c0_66] : memref<1x48xf32, #tpu.memory_space<vmem>>, vector<1x48xf32>
    %122 = vector.broadcast %121 : vector<1x48xf32> to vector<12x48xf32>
    %123 = arith.addf %120, %122 : vector<12x48xf32>
    %c0_67 = arith.constant 0 : index
    %c0_68 = arith.constant 0 : index
    %124 = vector.load %arg14[%c0_67, %c0_68] : memref<16x48xf32, #tpu.memory_space<vmem>>, vector<16x48xf32>
    %cst_69 = arith.constant dense<0.000000e+00> : vector<12x48xf32>
    %125 = tpu.matmul %92, %124, %cst_69 {dimension_numbers = #tpu.dot_dimension_numbers<[1], [0], [0], [1], [0, 0, 1, 1], [], []>} : vector<12x16xf32>, vector<16x48xf32>, vector<12x48xf32> -> vector<12x48xf32>
    %c0_70 = arith.constant 0 : index
    %c0_71 = arith.constant 0 : index
    %126 = vector.load %arg16[%c0_70, %c0_71] : memref<1x48xf32, #tpu.memory_space<vmem>>, vector<1x48xf32>
    %127 = vector.broadcast %126 : vector<1x48xf32> to vector<12x48xf32>
    %128 = arith.addf %125, %127 : vector<12x48xf32>
    %129 = vector.extract_strided_slice %123 {offsets = [0, 0], sizes = [12, 16], strides = [1, 1]} : vector<12x48xf32> to vector<12x16xf32>
    %130 = vector.extract_strided_slice %128 {offsets = [0, 0], sizes = [12, 16], strides = [1, 1]} : vector<12x48xf32> to vector<12x16xf32>
    %131 = arith.addf %129, %130 : vector<12x16xf32>
    %132 = arith.negf %131 : vector<12x16xf32>
    %133 = math.exp %132 : vector<12x16xf32>
    %cst_72 = arith.constant 1.000000e+00 : f32
    %134 = vector.broadcast %cst_72 : f32 to vector<12x16xf32>
    %135 = arith.addf %134, %133 : vector<12x16xf32>
    %136 = arith.divf %134, %135 : vector<12x16xf32>
    %137 = vector.extract_strided_slice %123 {offsets = [0, 16], sizes = [12, 16], strides = [1, 1]} : vector<12x48xf32> to vector<12x16xf32>
    %138 = vector.extract_strided_slice %128 {offsets = [0, 16], sizes = [12, 16], strides = [1, 1]} : vector<12x48xf32> to vector<12x16xf32>
    %139 = arith.addf %137, %138 : vector<12x16xf32>
    %140 = arith.negf %139 : vector<12x16xf32>
    %141 = math.exp %140 : vector<12x16xf32>
    %cst_73 = arith.constant 1.000000e+00 : f32
    %142 = vector.broadcast %cst_73 : f32 to vector<12x16xf32>
    %143 = arith.addf %142, %141 : vector<12x16xf32>
    %144 = arith.divf %142, %143 : vector<12x16xf32>
    %145 = vector.extract_strided_slice %123 {offsets = [0, 32], sizes = [12, 16], strides = [1, 1]} : vector<12x48xf32> to vector<12x16xf32>
    %146 = vector.extract_strided_slice %128 {offsets = [0, 32], sizes = [12, 16], strides = [1, 1]} : vector<12x48xf32> to vector<12x16xf32>
    %147 = arith.mulf %136, %146 : vector<12x16xf32>
    %148 = arith.addf %145, %147 : vector<12x16xf32>
    %149 = math.tanh %148 : vector<12x16xf32>
    %cst_74 = arith.constant 1.000000e+00 : f32
    %150 = vector.broadcast %cst_74 : f32 to vector<12x16xf32>
    %151 = arith.subf %150, %144 : vector<12x16xf32>
    %152 = arith.mulf %151, %149 : vector<12x16xf32>
    %153 = arith.mulf %144, %92 : vector<12x16xf32>
    %154 = arith.addf %152, %153 : vector<12x16xf32>
    %c4 = arith.constant 4 : index
    %155 = memref.load %arg19[%c4] : memref<8xf32, #tpu.memory_space<smem>>
    %156 = vector.broadcast %155 : f32 to vector<12x16xf32>
    %157 = arith.mulf %156, %154 : vector<12x16xf32>
    %158 = arith.addf %96, %157 : vector<12x16xf32>
    %c0_75 = arith.constant 0 : index
    %c0_76 = arith.constant 0 : index
    %159 = vector.load %arg2[%c0_75, %c0_76] : memref<24x12xf32, #tpu.memory_space<vmem>>, vector<24x12xf32>
    %cst_77 = arith.constant dense<0.000000e+00> : vector<24x16xf32>
    %160 = tpu.matmul %159, %154, %cst_77 {dimension_numbers = #tpu.dot_dimension_numbers<[1], [0], [0], [1], [0, 0, 1, 1], [], []>} : vector<24x12xf32>, vector<12x16xf32>, vector<24x16xf32> -> vector<24x16xf32>
    %cst_78 = arith.constant dense<0.000000e+00> : vector<24x256xf32>
    %161 = tpu.matmul %160, %31, %cst_78 {dimension_numbers = #tpu.dot_dimension_numbers<[1], [0], [0], [1], [0, 0, 1, 1], [], []>} : vector<24x16xf32>, vector<16x256xf32>, vector<24x256xf32> -> vector<24x256xf32>
    %162 = arith.mulf %161, %20 : vector<24x256xf32>
    %cst_79 = arith.constant dense<0.000000e+00> : vector<24x16xf32>
    %163 = tpu.matmul %162, %33, %cst_79 {dimension_numbers = #tpu.dot_dimension_numbers<[1], [0], [0], [1], [0, 0, 1, 1], [], []>} : vector<24x256xf32>, vector<256x16xf32>, vector<24x16xf32> -> vector<24x16xf32>
    %c0_80 = arith.constant 0 : index
    %c0_81 = arith.constant 0 : index
    %164 = vector.load %arg3[%c0_80, %c0_81] : memref<12x24xf32, #tpu.memory_space<vmem>>, vector<12x24xf32>
    %cst_82 = arith.constant dense<0.000000e+00> : vector<12x16xf32>
    %165 = tpu.matmul %164, %163, %cst_82 {dimension_numbers = #tpu.dot_dimension_numbers<[1], [0], [0], [1], [0, 0, 1, 1], [], []>} : vector<12x24xf32>, vector<24x16xf32>, vector<12x16xf32> -> vector<12x16xf32>
    %c0_83 = arith.constant 0 : index
    %c0_84 = arith.constant 0 : index
    %166 = vector.load %arg12[%c0_83, %c0_84] : memref<1x16xf32, #tpu.memory_space<vmem>>, vector<1x16xf32>
    %167 = vector.broadcast %166 : vector<1x16xf32> to vector<12x16xf32>
    %168 = arith.addf %165, %167 : vector<12x16xf32>
    %cst_85 = arith.constant 0.000000e+00 : f32
    %169 = vector.broadcast %cst_85 : f32 to vector<12x16xf32>
    %170 = arith.maximumf %168, %169 : vector<12x16xf32>
    %c0_86 = arith.constant 0 : index
    %171 = memref.load %arg19[%c0_86] : memref<8xf32, #tpu.memory_space<smem>>
    %172 = vector.broadcast %171 : f32 to vector<12x16xf32>
    %173 = arith.mulf %172, %154 : vector<12x16xf32>
    %c1_87 = arith.constant 1 : index
    %174 = memref.load %arg19[%c1_87] : memref<8xf32, #tpu.memory_space<smem>>
    %175 = vector.broadcast %174 : f32 to vector<12x16xf32>
    %176 = arith.mulf %175, %170 : vector<12x16xf32>
    %177 = arith.addf %173, %176 : vector<12x16xf32>
    %c2_88 = arith.constant 2 : index
    %178 = memref.load %arg19[%c2_88] : memref<8xf32, #tpu.memory_space<smem>>
    %179 = vector.broadcast %178 : f32 to vector<12x16xf32>
    %180 = arith.addf %177, %179 : vector<12x16xf32>
    %c0_89 = arith.constant 0 : index
    %c0_90 = arith.constant 0 : index
    %181 = vector.load %arg13[%c0_89, %c0_90] : memref<16x48xf32, #tpu.memory_space<vmem>>, vector<16x48xf32>
    %cst_91 = arith.constant dense<0.000000e+00> : vector<12x48xf32>
    %182 = tpu.matmul %180, %181, %cst_91 {dimension_numbers = #tpu.dot_dimension_numbers<[1], [0], [0], [1], [0, 0, 1, 1], [], []>} : vector<12x16xf32>, vector<16x48xf32>, vector<12x48xf32> -> vector<12x48xf32>
    %c0_92 = arith.constant 0 : index
    %c0_93 = arith.constant 0 : index
    %183 = vector.load %arg15[%c0_92, %c0_93] : memref<1x48xf32, #tpu.memory_space<vmem>>, vector<1x48xf32>
    %184 = vector.broadcast %183 : vector<1x48xf32> to vector<12x48xf32>
    %185 = arith.addf %182, %184 : vector<12x48xf32>
    %c0_94 = arith.constant 0 : index
    %c0_95 = arith.constant 0 : index
    %186 = vector.load %arg14[%c0_94, %c0_95] : memref<16x48xf32, #tpu.memory_space<vmem>>, vector<16x48xf32>
    %cst_96 = arith.constant dense<0.000000e+00> : vector<12x48xf32>
    %187 = tpu.matmul %154, %186, %cst_96 {dimension_numbers = #tpu.dot_dimension_numbers<[1], [0], [0], [1], [0, 0, 1, 1], [], []>} : vector<12x16xf32>, vector<16x48xf32>, vector<12x48xf32> -> vector<12x48xf32>
    %c0_97 = arith.constant 0 : index
    %c0_98 = arith.constant 0 : index
    %188 = vector.load %arg16[%c0_97, %c0_98] : memref<1x48xf32, #tpu.memory_space<vmem>>, vector<1x48xf32>
    %189 = vector.broadcast %188 : vector<1x48xf32> to vector<12x48xf32>
    %190 = arith.addf %187, %189 : vector<12x48xf32>
    %191 = vector.extract_strided_slice %185 {offsets = [0, 0], sizes = [12, 16], strides = [1, 1]} : vector<12x48xf32> to vector<12x16xf32>
    %192 = vector.extract_strided_slice %190 {offsets = [0, 0], sizes = [12, 16], strides = [1, 1]} : vector<12x48xf32> to vector<12x16xf32>
    %193 = arith.addf %191, %192 : vector<12x16xf32>
    %194 = arith.negf %193 : vector<12x16xf32>
    %195 = math.exp %194 : vector<12x16xf32>
    %cst_99 = arith.constant 1.000000e+00 : f32
    %196 = vector.broadcast %cst_99 : f32 to vector<12x16xf32>
    %197 = arith.addf %196, %195 : vector<12x16xf32>
    %198 = arith.divf %196, %197 : vector<12x16xf32>
    %199 = vector.extract_strided_slice %185 {offsets = [0, 16], sizes = [12, 16], strides = [1, 1]} : vector<12x48xf32> to vector<12x16xf32>
    %200 = vector.extract_strided_slice %190 {offsets = [0, 16], sizes = [12, 16], strides = [1, 1]} : vector<12x48xf32> to vector<12x16xf32>
    %201 = arith.addf %199, %200 : vector<12x16xf32>
    %202 = arith.negf %201 : vector<12x16xf32>
    %203 = math.exp %202 : vector<12x16xf32>
    %cst_100 = arith.constant 1.000000e+00 : f32
    %204 = vector.broadcast %cst_100 : f32 to vector<12x16xf32>
    %205 = arith.addf %204, %203 : vector<12x16xf32>
    %206 = arith.divf %204, %205 : vector<12x16xf32>
    %207 = vector.extract_strided_slice %185 {offsets = [0, 32], sizes = [12, 16], strides = [1, 1]} : vector<12x48xf32> to vector<12x16xf32>
    %208 = vector.extract_strided_slice %190 {offsets = [0, 32], sizes = [12, 16], strides = [1, 1]} : vector<12x48xf32> to vector<12x16xf32>
    %209 = arith.mulf %198, %208 : vector<12x16xf32>
    %210 = arith.addf %207, %209 : vector<12x16xf32>
    %211 = math.tanh %210 : vector<12x16xf32>
    %cst_101 = arith.constant 1.000000e+00 : f32
    %212 = vector.broadcast %cst_101 : f32 to vector<12x16xf32>
    %213 = arith.subf %212, %206 : vector<12x16xf32>
    %214 = arith.mulf %213, %211 : vector<12x16xf32>
    %215 = arith.mulf %206, %154 : vector<12x16xf32>
    %216 = arith.addf %214, %215 : vector<12x16xf32>
    %c5 = arith.constant 5 : index
    %217 = memref.load %arg19[%c5] : memref<8xf32, #tpu.memory_space<smem>>
    %218 = vector.broadcast %217 : f32 to vector<12x16xf32>
    %219 = arith.mulf %218, %216 : vector<12x16xf32>
    %220 = arith.addf %158, %219 : vector<12x16xf32>
    %c6 = arith.constant 6 : index
    %221 = memref.load %arg19[%c6] : memref<8xf32, #tpu.memory_space<smem>>
    %222 = vector.broadcast %221 : f32 to vector<12x16xf32>
    %223 = arith.addf %220, %222 : vector<12x16xf32>
    %224 = tpu.iota {dimensions = array<i32: 0>} : vector<16x16xi32>
    %225 = tpu.iota {dimensions = array<i32: 1>} : vector<16x16xi32>
    %226 = arith.cmpi eq, %224, %225 : vector<16x16xi32>
    %227 = arith.extui %226 : vector<16x16xi1> to vector<16x16xi32>
    %228 = arith.sitofp %227 : vector<16x16xi32> to vector<16x16xf32>
    %cst_102 = arith.constant dense<0.000000e+00> : vector<16x12xf32>
    %229 = tpu.matmul %228, %223, %cst_102 {dimension_numbers = #tpu.dot_dimension_numbers<[1], [1], [0], [0], [0, 0, 1, 0], [], []>} : vector<16x16xf32>, vector<12x16xf32>, vector<16x12xf32> -> vector<16x12xf32>
    %c0_103 = arith.constant 0 : index
    %c0_104 = arith.constant 0 : index
    %230 = vector.load %arg4[%c0_103, %c0_104] : memref<2x12xf32, #tpu.memory_space<vmem>>, vector<2x12xf32>
    %cst_105 = arith.constant 0.000000e+00 : f32
    %231 = vector.broadcast %cst_105 : f32 to vector<2x32xf32>
    %cst_106 = arith.constant 0.000000e+00 : f32
    %232 = vector.broadcast %cst_106 : f32 to vector<2x16xf32>
    %c0_107 = arith.constant 0 : index
    %c0_108 = arith.constant 0 : index
    %233 = vector.load %arg17[%c0_107, %c0_108] : memref<32x64xf32, #tpu.memory_space<vmem>>, vector<32x64xf32>
    %cst_109 = arith.constant dense<0.000000e+00> : vector<2x64xf32>
    %234 = tpu.matmul %231, %233, %cst_109 {dimension_numbers = #tpu.dot_dimension_numbers<[1], [0], [0], [1], [0, 0, 1, 1], [], []>} : vector<2x32xf32>, vector<32x64xf32>, vector<2x64xf32> -> vector<2x64xf32>
    %c0_110 = arith.constant 0 : index
    %c0_111 = arith.constant 0 : index
    %235 = vector.load %arg18[%c0_110, %c0_111] : memref<1x64xf32, #tpu.memory_space<vmem>>, vector<1x64xf32>
    %236 = vector.broadcast %235 : vector<1x64xf32> to vector<2x64xf32>
    %237 = arith.addf %234, %236 : vector<2x64xf32>
    %238 = vector.extract_strided_slice %237 {offsets = [0, 0], sizes = [2, 16], strides = [1, 1]} : vector<2x64xf32> to vector<2x16xf32>
    %239 = arith.negf %238 : vector<2x16xf32>
    %240 = math.exp %239 : vector<2x16xf32>
    %cst_112 = arith.constant 1.000000e+00 : f32
    %241 = vector.broadcast %cst_112 : f32 to vector<2x16xf32>
    %242 = arith.addf %241, %240 : vector<2x16xf32>
    %243 = arith.divf %241, %242 : vector<2x16xf32>
    %244 = vector.extract_strided_slice %237 {offsets = [0, 16], sizes = [2, 16], strides = [1, 1]} : vector<2x64xf32> to vector<2x16xf32>
    %245 = arith.negf %244 : vector<2x16xf32>
    %246 = math.exp %245 : vector<2x16xf32>
    %cst_113 = arith.constant 1.000000e+00 : f32
    %247 = vector.broadcast %cst_113 : f32 to vector<2x16xf32>
    %248 = arith.addf %247, %246 : vector<2x16xf32>
    %249 = arith.divf %247, %248 : vector<2x16xf32>
    %250 = vector.extract_strided_slice %237 {offsets = [0, 32], sizes = [2, 16], strides = [1, 1]} : vector<2x64xf32> to vector<2x16xf32>
    %251 = math.tanh %250 : vector<2x16xf32>
    %252 = vector.extract_strided_slice %237 {offsets = [0, 48], sizes = [2, 16], strides = [1, 1]} : vector<2x64xf32> to vector<2x16xf32>
    %253 = arith.negf %252 : vector<2x16xf32>
    %254 = math.exp %253 : vector<2x16xf32>
    %cst_114 = arith.constant 1.000000e+00 : f32
    %255 = vector.broadcast %cst_114 : f32 to vector<2x16xf32>
    %256 = arith.addf %255, %254 : vector<2x16xf32>
    %257 = arith.divf %255, %256 : vector<2x16xf32>
    %258 = arith.mulf %249, %232 : vector<2x16xf32>
    %259 = arith.mulf %243, %251 : vector<2x16xf32>
    %260 = arith.addf %258, %259 : vector<2x16xf32>
    %261 = math.tanh %260 : vector<2x16xf32>
    %262 = arith.mulf %257, %261 : vector<2x16xf32>
    %cst_115 = arith.constant dense<0.000000e+00> : vector<2x12xf32>
    %263 = tpu.matmul %262, %229, %cst_115 {dimension_numbers = #tpu.dot_dimension_numbers<[1], [0], [0], [1], [0, 0, 1, 1], [], []>} : vector<2x16xf32>, vector<16x12xf32>, vector<2x12xf32> -> vector<2x12xf32>
    %cst_116 = arith.constant 5.000000e-01 : f32
    %264 = vector.broadcast %cst_116 : f32 to vector<2x12xf32>
    %265 = arith.cmpf ogt, %230, %264 : vector<2x12xf32>
    %cst_117 = arith.constant -1.000000e+30 : f32
    %266 = vector.broadcast %cst_117 : f32 to vector<2x12xf32>
    %267 = arith.select %265, %263, %266 : vector<2x12xi1>, vector<2x12xf32>
    %cst_118 = arith.constant dense<0xFF800000> : vector<2xf32>
    %268 = vector.multi_reduction <maximumf>, %267, %cst_118 [1] : vector<2x12xf32> to vector<2xf32>
    %269 = vector.shape_cast %268 : vector<2xf32> to vector<2x1xf32>
    %270 = vector.broadcast %269 : vector<2x1xf32> to vector<2x12xf32>
    %271 = arith.subf %267, %270 : vector<2x12xf32>
    %272 = math.exp %271 : vector<2x12xf32>
    %273 = arith.mulf %272, %230 : vector<2x12xf32>
    %cst_119 = arith.constant dense<0.000000e+00> : vector<2xf32>
    %274 = vector.multi_reduction <add>, %273, %cst_119 [1] : vector<2x12xf32> to vector<2xf32>
    %275 = vector.shape_cast %274 : vector<2xf32> to vector<2x1xf32>
    %cst_120 = arith.constant 9.99999968E-21 : f32
    %276 = vector.broadcast %cst_120 : f32 to vector<2x1xf32>
    %277 = arith.maximumf %275, %276 : vector<2x1xf32>
    %278 = vector.broadcast %277 : vector<2x1xf32> to vector<2x12xf32>
    %279 = arith.divf %273, %278 : vector<2x12xf32>
    %cst_121 = arith.constant dense<0.000000e+00> : vector<2x16xf32>
    %280 = tpu.matmul %279, %223, %cst_121 {dimension_numbers = #tpu.dot_dimension_numbers<[1], [0], [0], [1], [0, 0, 1, 1], [], []>} : vector<2x12xf32>, vector<12x16xf32>, vector<2x16xf32> -> vector<2x16xf32>
    %281 = tpu.concatenate %262, %280 in 1 : vector<2x16xf32>, vector<2x16xf32> -> vector<2x32xf32>
    %c0_122 = arith.constant 0 : index
    %c0_123 = arith.constant 0 : index
    %282 = vector.load %arg17[%c0_122, %c0_123] : memref<32x64xf32, #tpu.memory_space<vmem>>, vector<32x64xf32>
    %cst_124 = arith.constant dense<0.000000e+00> : vector<2x64xf32>
    %283 = tpu.matmul %281, %282, %cst_124 {dimension_numbers = #tpu.dot_dimension_numbers<[1], [0], [0], [1], [0, 0, 1, 1], [], []>} : vector<2x32xf32>, vector<32x64xf32>, vector<2x64xf32> -> vector<2x64xf32>
    %c0_125 = arith.constant 0 : index
    %c0_126 = arith.constant 0 : index
    %284 = vector.load %arg18[%c0_125, %c0_126] : memref<1x64xf32, #tpu.memory_space<vmem>>, vector<1x64xf32>
    %285 = vector.broadcast %284 : vector<1x64xf32> to vector<2x64xf32>
    %286 = arith.addf %283, %285 : vector<2x64xf32>
    %287 = vector.extract_strided_slice %286 {offsets = [0, 0], sizes = [2, 16], strides = [1, 1]} : vector<2x64xf32> to vector<2x16xf32>
    %288 = arith.negf %287 : vector<2x16xf32>
    %289 = math.exp %288 : vector<2x16xf32>
    %cst_127 = arith.constant 1.000000e+00 : f32
    %290 = vector.broadcast %cst_127 : f32 to vector<2x16xf32>
    %291 = arith.addf %290, %289 : vector<2x16xf32>
    %292 = arith.divf %290, %291 : vector<2x16xf32>
    %293 = vector.extract_strided_slice %286 {offsets = [0, 16], sizes = [2, 16], strides = [1, 1]} : vector<2x64xf32> to vector<2x16xf32>
    %294 = arith.negf %293 : vector<2x16xf32>
    %295 = math.exp %294 : vector<2x16xf32>
    %cst_128 = arith.constant 1.000000e+00 : f32
    %296 = vector.broadcast %cst_128 : f32 to vector<2x16xf32>
    %297 = arith.addf %296, %295 : vector<2x16xf32>
    %298 = arith.divf %296, %297 : vector<2x16xf32>
    %299 = vector.extract_strided_slice %286 {offsets = [0, 32], sizes = [2, 16], strides = [1, 1]} : vector<2x64xf32> to vector<2x16xf32>
    %300 = math.tanh %299 : vector<2x16xf32>
    %301 = vector.extract_strided_slice %286 {offsets = [0, 48], sizes = [2, 16], strides = [1, 1]} : vector<2x64xf32> to vector<2x16xf32>
    %302 = arith.negf %301 : vector<2x16xf32>
    %303 = math.exp %302 : vector<2x16xf32>
    %cst_129 = arith.constant 1.000000e+00 : f32
    %304 = vector.broadcast %cst_129 : f32 to vector<2x16xf32>
    %305 = arith.addf %304, %303 : vector<2x16xf32>
    %306 = arith.divf %304, %305 : vector<2x16xf32>
    %307 = arith.mulf %298, %260 : vector<2x16xf32>
    %308 = arith.mulf %292, %300 : vector<2x16xf32>
    %309 = arith.addf %307, %308 : vector<2x16xf32>
    %310 = math.tanh %309 : vector<2x16xf32>
    %311 = arith.mulf %306, %310 : vector<2x16xf32>
    %cst_130 = arith.constant dense<0.000000e+00> : vector<2x12xf32>
    %312 = tpu.matmul %311, %229, %cst_130 {dimension_numbers = #tpu.dot_dimension_numbers<[1], [0], [0], [1], [0, 0, 1, 1], [], []>} : vector<2x16xf32>, vector<16x12xf32>, vector<2x12xf32> -> vector<2x12xf32>
    %cst_131 = arith.constant 5.000000e-01 : f32
    %313 = vector.broadcast %cst_131 : f32 to vector<2x12xf32>
    %314 = arith.cmpf ogt, %230, %313 : vector<2x12xf32>
    %cst_132 = arith.constant -1.000000e+30 : f32
    %315 = vector.broadcast %cst_132 : f32 to vector<2x12xf32>
    %316 = arith.select %314, %312, %315 : vector<2x12xi1>, vector<2x12xf32>
    %cst_133 = arith.constant dense<0xFF800000> : vector<2xf32>
    %317 = vector.multi_reduction <maximumf>, %316, %cst_133 [1] : vector<2x12xf32> to vector<2xf32>
    %318 = vector.shape_cast %317 : vector<2xf32> to vector<2x1xf32>
    %319 = vector.broadcast %318 : vector<2x1xf32> to vector<2x12xf32>
    %320 = arith.subf %316, %319 : vector<2x12xf32>
    %321 = math.exp %320 : vector<2x12xf32>
    %322 = arith.mulf %321, %230 : vector<2x12xf32>
    %cst_134 = arith.constant dense<0.000000e+00> : vector<2xf32>
    %323 = vector.multi_reduction <add>, %322, %cst_134 [1] : vector<2x12xf32> to vector<2xf32>
    %324 = vector.shape_cast %323 : vector<2xf32> to vector<2x1xf32>
    %cst_135 = arith.constant 9.99999968E-21 : f32
    %325 = vector.broadcast %cst_135 : f32 to vector<2x1xf32>
    %326 = arith.maximumf %324, %325 : vector<2x1xf32>
    %327 = vector.broadcast %326 : vector<2x1xf32> to vector<2x12xf32>
    %328 = arith.divf %322, %327 : vector<2x12xf32>
    %cst_136 = arith.constant dense<0.000000e+00> : vector<2x16xf32>
    %329 = tpu.matmul %328, %223, %cst_136 {dimension_numbers = #tpu.dot_dimension_numbers<[1], [0], [0], [1], [0, 0, 1, 1], [], []>} : vector<2x12xf32>, vector<12x16xf32>, vector<2x16xf32> -> vector<2x16xf32>
    %330 = tpu.concatenate %311, %329 in 1 : vector<2x16xf32>, vector<2x16xf32> -> vector<2x32xf32>
    %c0_137 = arith.constant 0 : index
    %c0_138 = arith.constant 0 : index
    %331 = vector.load %arg17[%c0_137, %c0_138] : memref<32x64xf32, #tpu.memory_space<vmem>>, vector<32x64xf32>
    %cst_139 = arith.constant dense<0.000000e+00> : vector<2x64xf32>
    %332 = tpu.matmul %330, %331, %cst_139 {dimension_numbers = #tpu.dot_dimension_numbers<[1], [0], [0], [1], [0, 0, 1, 1], [], []>} : vector<2x32xf32>, vector<32x64xf32>, vector<2x64xf32> -> vector<2x64xf32>
    %c0_140 = arith.constant 0 : index
    %c0_141 = arith.constant 0 : index
    %333 = vector.load %arg18[%c0_140, %c0_141] : memref<1x64xf32, #tpu.memory_space<vmem>>, vector<1x64xf32>
    %334 = vector.broadcast %333 : vector<1x64xf32> to vector<2x64xf32>
    %335 = arith.addf %332, %334 : vector<2x64xf32>
    %336 = vector.extract_strided_slice %335 {offsets = [0, 0], sizes = [2, 16], strides = [1, 1]} : vector<2x64xf32> to vector<2x16xf32>
    %337 = arith.negf %336 : vector<2x16xf32>
    %338 = math.exp %337 : vector<2x16xf32>
    %cst_142 = arith.constant 1.000000e+00 : f32
    %339 = vector.broadcast %cst_142 : f32 to vector<2x16xf32>
    %340 = arith.addf %339, %338 : vector<2x16xf32>
    %341 = arith.divf %339, %340 : vector<2x16xf32>
    %342 = vector.extract_strided_slice %335 {offsets = [0, 16], sizes = [2, 16], strides = [1, 1]} : vector<2x64xf32> to vector<2x16xf32>
    %343 = arith.negf %342 : vector<2x16xf32>
    %344 = math.exp %343 : vector<2x16xf32>
    %cst_143 = arith.constant 1.000000e+00 : f32
    %345 = vector.broadcast %cst_143 : f32 to vector<2x16xf32>
    %346 = arith.addf %345, %344 : vector<2x16xf32>
    %347 = arith.divf %345, %346 : vector<2x16xf32>
    %348 = vector.extract_strided_slice %335 {offsets = [0, 32], sizes = [2, 16], strides = [1, 1]} : vector<2x64xf32> to vector<2x16xf32>
    %349 = math.tanh %348 : vector<2x16xf32>
    %350 = vector.extract_strided_slice %335 {offsets = [0, 48], sizes = [2, 16], strides = [1, 1]} : vector<2x64xf32> to vector<2x16xf32>
    %351 = arith.negf %350 : vector<2x16xf32>
    %352 = math.exp %351 : vector<2x16xf32>
    %cst_144 = arith.constant 1.000000e+00 : f32
    %353 = vector.broadcast %cst_144 : f32 to vector<2x16xf32>
    %354 = arith.addf %353, %352 : vector<2x16xf32>
    %355 = arith.divf %353, %354 : vector<2x16xf32>
    %356 = arith.mulf %347, %309 : vector<2x16xf32>
    %357 = arith.mulf %341, %349 : vector<2x16xf32>
    %358 = arith.addf %356, %357 : vector<2x16xf32>
    %359 = math.tanh %358 : vector<2x16xf32>
    %360 = arith.mulf %355, %359 : vector<2x16xf32>
    %cst_145 = arith.constant dense<0.000000e+00> : vector<2x12xf32>
    %361 = tpu.matmul %360, %229, %cst_145 {dimension_numbers = #tpu.dot_dimension_numbers<[1], [0], [0], [1], [0, 0, 1, 1], [], []>} : vector<2x16xf32>, vector<16x12xf32>, vector<2x12xf32> -> vector<2x12xf32>
    %cst_146 = arith.constant 5.000000e-01 : f32
    %362 = vector.broadcast %cst_146 : f32 to vector<2x12xf32>
    %363 = arith.cmpf ogt, %230, %362 : vector<2x12xf32>
    %cst_147 = arith.constant -1.000000e+30 : f32
    %364 = vector.broadcast %cst_147 : f32 to vector<2x12xf32>
    %365 = arith.select %363, %361, %364 : vector<2x12xi1>, vector<2x12xf32>
    %cst_148 = arith.constant dense<0xFF800000> : vector<2xf32>
    %366 = vector.multi_reduction <maximumf>, %365, %cst_148 [1] : vector<2x12xf32> to vector<2xf32>
    %367 = vector.shape_cast %366 : vector<2xf32> to vector<2x1xf32>
    %368 = vector.broadcast %367 : vector<2x1xf32> to vector<2x12xf32>
    %369 = arith.subf %365, %368 : vector<2x12xf32>
    %370 = math.exp %369 : vector<2x12xf32>
    %371 = arith.mulf %370, %230 : vector<2x12xf32>
    %cst_149 = arith.constant dense<0.000000e+00> : vector<2xf32>
    %372 = vector.multi_reduction <add>, %371, %cst_149 [1] : vector<2x12xf32> to vector<2xf32>
    %373 = vector.shape_cast %372 : vector<2xf32> to vector<2x1xf32>
    %cst_150 = arith.constant 9.99999968E-21 : f32
    %374 = vector.broadcast %cst_150 : f32 to vector<2x1xf32>
    %375 = arith.maximumf %373, %374 : vector<2x1xf32>
    %376 = vector.broadcast %375 : vector<2x1xf32> to vector<2x12xf32>
    %377 = arith.divf %371, %376 : vector<2x12xf32>
    %cst_151 = arith.constant dense<0.000000e+00> : vector<2x16xf32>
    %378 = tpu.matmul %377, %223, %cst_151 {dimension_numbers = #tpu.dot_dimension_numbers<[1], [0], [0], [1], [0, 0, 1, 1], [], []>} : vector<2x12xf32>, vector<12x16xf32>, vector<2x16xf32> -> vector<2x16xf32>
    %379 = tpu.concatenate %360, %378 in 1 : vector<2x16xf32>, vector<2x16xf32> -> vector<2x32xf32>
    %c0_152 = arith.constant 0 : index
    %c0_153 = arith.constant 0 : index
    %380 = vector.load %arg20[%c0_152, %c0_153] : memref<2x32xf32, #tpu.memory_space<vmem>>, vector<2x32xf32>
    tpu.vector_store %arg20[%c0_152, %c0_153], %379 {strides = array<i32>} : memref<2x32xf32, #tpu.memory_space<vmem>>, vector<2x32xf32>,
    return
  }
}

</mosaic_0001>

<llo_original>
// kernel: tpu_custom_call.1
$region0: #{tpu_custom_call.1}
  #allocation0 [shape = 'u32[]', space=smem, size = 0x4, offset = 0x4, fixed_abs, tag = 'smem constant byte address 0x4 - core index']
  #allocation1 [shape = 'u32[72,128]{1,0:T(1,128)}', space=vmem, size = 0x9000, scoped, tag = 'internal scratch']
  %s0 = inlined_call_operand.vmem [shape: f32[12,4], index: 0, kind: input, shape index: {}]
  %s1 = inlined_call_operand.vmem [shape: f32[24,5], index: 1, kind: input, shape index: {}]
  %s2 = inlined_call_operand.vmem [shape: f32[24,12], index: 2, kind: input, shape index: {}]
  %s3 = inlined_call_operand.vmem [shape: f32[12,24], index: 3, kind: input, shape index: {}]
  %s4 = inlined_call_operand.vmem [shape: f32[2,12], index: 4, kind: input, shape index: {}]
  %s5 = inlined_call_operand.vmem [shape: bf16[256,16], index: 5, kind: input, shape index: {}]
  %s6 = inlined_call_operand.vmem [shape: f32[4,16], index: 6, kind: input, shape index: {}]
  %s7 = inlined_call_operand.vmem [shape: f32[1,16], index: 7, kind: input, shape index: {}]
  %s8 = inlined_call_operand.vmem [shape: f32[5,128], index: 8, kind: input, shape index: {}]
  %s9 = inlined_call_operand.vmem [shape: f32[1,128], index: 9, kind: input, shape index: {}]
  %s10 = inlined_call_operand.hbm [shape: f32[128,256], index: 10, kind: input, shape index: {}]
  %s11 = inlined_call_operand.vmem [shape: f32[1,256], index: 11, kind: input, shape index: {}]
  %s12 = inlined_call_operand.vmem [shape: f32[1,16], index: 12, kind: input, shape index: {}]
  %s13 = inlined_call_operand.vmem [shape: f32[16,48], index: 13, kind: input, shape index: {}]
  %s14 = inlined_call_operand.vmem [shape: f32[16,48], index: 14, kind: input, shape index: {}]
  %s15 = inlined_call_operand.vmem [shape: f32[1,48], index: 15, kind: input, shape index: {}]
  %s16 = inlined_call_operand.vmem [shape: f32[1,48], index: 16, kind: input, shape index: {}]
  %s17 = inlined_call_operand.vmem [shape: f32[32,64], index: 17, kind: input, shape index: {}]
  %s18 = inlined_call_operand.vmem [shape: f32[1,64], index: 18, kind: input, shape index: {}]
  %s19 = inlined_call_operand.vmem [shape: f32[8], index: 19, kind: input, shape index: {}]
  %s20 = inlined_call_operand.hbm [shape: f32[2,32], index: 20, kind: output, shape index: {}]
  %s21 = sld [smem:[#allocation0]]
  $region98: #{tpu_custom_call.1} parent=0
    _
  %s23 = ssub.s32 1, %s21
  %s24 = scalar_select 0, %s23, %s21
  $region1: #{tpu_custom_call.1} parent=0
    #allocation2 [shape = 'u8[131072]{0}', space=vmem, size = 0x20000, scoped, tag = 'input window, operand 10, single buffered']
    #allocation3 [shape = 's32[1]{0}', space=sflag, size = 0x4, scoped, tag = 'scoped memory for tpu_custom_call.1']
    #allocation4 [shape = 's32[1]{0}', space=sflag, size = 0x4, scoped, tag = 'scoped memory for tpu_custom_call.1']
    #allocation5 [shape = 's32[1]{0}', space=sflag, size = 0x4, scoped, tag = 'scoped memory for tpu_custom_call.1']
    #allocation6 [shape = 'u8[512]{0}', space=smem, size = 0x200, scoped, tag = 'input window, operand 19, single buffered']
    #allocation7 [shape = 'u8[1024]{0}', space=vmem, size = 0x400, scoped, tag = 'output window, operand 0, single buffered']
    %25 = vsyncpa [#allocation3], 0
    %26 = vsyncpa [#allocation5], 0
    %27 = vsyncpa [#allocation4], 0
    // Predicated region
    $region2: #{tpu_custom_call.1} parent=1 // pred_check
      _
    $region3: #{tpu_custom_call.1} parent=1 // pred_check_branch
      %29 = sbr.rel (0) target = $region5
    $region4: #{tpu_custom_call.1} parent=1 // pred_region
      _
    $region5: #{tpu_custom_call.1} parent=1 // pred_fallthru
      _
    // Predicated region
    $region6: #{tpu_custom_call.1} parent=1 // pred_check
      _
    $region7: #{tpu_custom_call.1} parent=1 // pred_check_branch
      %31 = sbr.rel (0) target = $region9
    $region8: #{tpu_custom_call.1} parent=1 // pred_region
      _
    $region9: #{tpu_custom_call.1} parent=1 // pred_fallthru
      _
    // Predicated region
    $region10: #{tpu_custom_call.1} parent=1 // pred_check
      _
    $region11: #{tpu_custom_call.1} parent=1 // pred_check_branch
      %33 = sbr.rel (0) target = $region13
    $region12: #{tpu_custom_call.1} parent=1 // pred_region
      _
    $region13: #{tpu_custom_call.1} parent=1 // pred_fallthru
      _
    // Predicated region
    $region14: #{tpu_custom_call.1} parent=1 // pred_check
      _
    $region15: #{tpu_custom_call.1} parent=1 // pred_check_branch
      %35 = sbr.rel (0) target = $region17
    $region16: #{tpu_custom_call.1} parent=1 // pred_region
      _
    $region17: #{tpu_custom_call.1} parent=1 // pred_fallthru
      _
    // Predicated region
    $region18: #{tpu_custom_call.1} parent=1 // pred_check
      _
    $region19: #{tpu_custom_call.1} parent=1 // pred_check_branch
      %37 = sbr.rel (0) target = $region21
    $region20: #{tpu_custom_call.1} parent=1 // pred_region
      _
    $region21: #{tpu_custom_call.1} parent=1 // pred_fallthru
      _
    // Predicated region
    $region22: #{tpu_custom_call.1} parent=1 // pred_check
      _
    $region23: #{tpu_custom_call.1} parent=1 // pred_check_branch
      %39 = sbr.rel (0) target = $region25
    $region24: #{tpu_custom_call.1} parent=1 // pred_region
      _
    $region25: #{tpu_custom_call.1} parent=1 // pred_fallthru
      _
    // Predicated region
    $region26: #{tpu_custom_call.1} parent=1 // pred_check
      _
    $region27: #{tpu_custom_call.1} parent=1 // pred_check_branch
      %41 = sbr.rel (0) target = $region29
    $region28: #{tpu_custom_call.1} parent=1 // pred_region
      _
    $region29: #{tpu_custom_call.1} parent=1 // pred_fallthru
      _
    // Predicated region
    $region30: #{tpu_custom_call.1} parent=1 // pred_check
      _
    $region31: #{tpu_custom_call.1} parent=1 // pred_check_branch
      %43 = sbr.rel (0) target = $region33
    $region32: #{tpu_custom_call.1} parent=1 // pred_region
      _
    $region33: #{tpu_custom_call.1} parent=1 // pred_fallthru
      _
    // Predicated region
    $region34: #{tpu_custom_call.1} parent=1 // pred_check
      _
    $region35: #{tpu_custom_call.1} parent=1 // pred_check_branch
      %45 = sbr.rel (0) target = $region37
    $region36: #{tpu_custom_call.1} parent=1 // pred_region
      _
    $region37: #{tpu_custom_call.1} parent=1 // pred_fallthru
      _
    // Predicated region
    $region38: #{tpu_custom_call.1} parent=1 // pred_check
      _
    $region39: #{tpu_custom_call.1} parent=1 // pred_check_branch
      %47 = sbr.rel (0) target = $region41
    $region40: #{tpu_custom_call.1} parent=1 // pred_region
      _
    $region41: #{tpu_custom_call.1} parent=1 // pred_fallthru
      _
    // Predicated region
    $region42: #{tpu_custom_call.1} parent=1 // pred_check
      _
    $region43: #{tpu_custom_call.1} parent=1 // pred_check_branch
      %49 = sbr.rel (0) target = $region45
    $region44: #{tpu_custom_call.1} parent=1 // pred_region
      %51 = vsyncadd [#allocation3], 0
      %s52 = sshll.u32 %s10, 4
      %s53 = int_to_ptr.hbm [resolvable:$true] %s52
      %s54 = sshll.u32 [#allocation2], 4
      %s55 = int_to_ptr.vmem [resolvable:$true] %s54
      %60 = dma.hbm_to_vmem [thread:$0]  %s53, 4096, %s55, [#allocation3], 256, 256, 16
    $region45: #{tpu_custom_call.1} parent=1 // pred_fallthru
      _
    // Predicated region
    $region46: #{tpu_custom_call.1} parent=1 // pred_check
      _
    $region47: #{tpu_custom_call.1} parent=1 // pred_check_branch
      %62 = sbr.rel (0) target = $region49
    $region48: #{tpu_custom_call.1} parent=1 // pred_region
      _
    $region49: #{tpu_custom_call.1} parent=1 // pred_fallthru
      _
    // Predicated region
    $region50: #{tpu_custom_call.1} parent=1 // pred_check
      _
    $region51: #{tpu_custom_call.1} parent=1 // pred_check_branch
      %64 = sbr.rel (0) target = $region53
    $region52: #{tpu_custom_call.1} parent=1 // pred_region
      _
    $region53: #{tpu_custom_call.1} parent=1 // pred_fallthru
      _
    // Predicated region
    $region54: #{tpu_custom_call.1} parent=1 // pred_check
      _
    $region55: #{tpu_custom_call.1} parent=1 // pred_check_branch
      %66 = sbr.rel (0) target = $region57
    $region56: #{tpu_custom_call.1} parent=1 // pred_region
      _
    $region57: #{tpu_custom_call.1} parent=1 // pred_fallthru
      _
    // Predicated region
    $region58: #{tpu_custom_call.1} parent=1 // pred_check
      _
    $region59: #{tpu_custom_call.1} parent=1 // pred_check_branch
      %68 = sbr.rel (0) target = $region61
    $region60: #{tpu_custom_call.1} parent=1 // pred_region
      _
    $region61: #{tpu_custom_call.1} parent=1 // pred_fallthru
      _
    // Predicated region
    $region62: #{tpu_custom_call.1} parent=1 // pred_check
      _
    $region63: #{tpu_custom_call.1} parent=1 // pred_check_branch
      %70 = sbr.rel (0) target = $region65
    $region64: #{tpu_custom_call.1} parent=1 // pred_region
      _
    $region65: #{tpu_custom_call.1} parent=1 // pred_fallthru
      _
    // Predicated region
    $region66: #{tpu_custom_call.1} parent=1 // pred_check
      _
    $region67: #{tpu_custom_call.1} parent=1 // pred_check_branch
      %72 = sbr.rel (0) target = $region69
    $region68: #{tpu_custom_call.1} parent=1 // pred_region
      _
    $region69: #{tpu_custom_call.1} parent=1 // pred_fallthru
      _
    // Predicated region
    $region70: #{tpu_custom_call.1} parent=1 // pred_check
      _
    $region71: #{tpu_custom_call.1} parent=1 // pred_check_branch
      %74 = sbr.rel (0) target = $region73
    $region72: #{tpu_custom_call.1} parent=1 // pred_region
      _
    $region73: #{tpu_custom_call.1} parent=1 // pred_fallthru
      _
    // Predicated region
    $region74: #{tpu_custom_call.1} parent=1 // pred_check
      _
    $region75: #{tpu_custom_call.1} parent=1 // pred_check_branch
      %76 = sbr.rel (0) target = $region77
    $region76: #{tpu_custom_call.1} parent=1 // pred_region
      _
    $region77: #{tpu_custom_call.1} parent=1 // pred_fallthru
      _
    // Predicated region
    $region78: #{tpu_custom_call.1} parent=1 // pred_check
      _
    $region79: #{tpu_custom_call.1} parent=1 // pred_check_branch
      %78 = sbr.rel (0) target = $region81
    $region80: #{tpu_custom_call.1} parent=1 // pred_region
      %80 = vsyncadd [#allocation5], 0
      %s82 = sshll.u32 %s19, 4
      %s83 = int_to_ptr.vmem [resolvable:$true] %s82
      %85 = dma.vmem_to_smem %s83, 16, [#allocation6], [#allocation5]
    $region81: #{tpu_custom_call.1} parent=1 // pred_fallthru
      _
    // Predicated region
    $region82: #{tpu_custom_call.1} parent=1 // pred_check
      _
    $region83: #{tpu_custom_call.1} parent=1 // pred_check_branch
      %87 = sbr.rel (0) target = $region85
    $region84: #{tpu_custom_call.1} parent=1 // pred_region
      %89 = dma.done [#allocation3], 4096
    $region85: #{tpu_custom_call.1} parent=1 // pred_fallthru
      _
    // Predicated region
    $region86: #{tpu_custom_call.1} parent=1 // pred_check
      _
    $region87: #{tpu_custom_call.1} parent=1 // pred_check_branch
      %91 = sbr.rel (0) target = $region89
    $region88: #{tpu_custom_call.1} parent=1 // pred_region
      %93 = dma.done [#allocation5], 16
    $region89: #{tpu_custom_call.1} parent=1 // pred_fallthru
      _
    %94 = sfence
    %v95 = vld [vmem:[%s0] sm:$0xff]
    %v96 = vld [vmem:[%s0 + $0x8] sm:$0xf]
    %v97 = vld [vmem:[%s6] sm:$0xf]
    %v98 = vld [vmem:[%s7] sm:$0x1]
    %v100 = vperm.slane %v98, 0
    %vm102 = vcmask 31744
    %v104 = vsel %vm102, %v95, 0
    %v107 = vsel %vm102, %v96, 0
    %vm109 = vcmask 1043456
    %v111 = vsel %vm109, %v97, 0
    %113 = vmatpush.msra.mxu0 0.0
    %114 = vmatpush.msra.mxu0 0.0
    %115 = vmatpush.msra.mxu0 0.0
    %116 = vmatpush.msra.mxu0 0.0
    %117 = vmatpush.msra.mxu0 0.0
    %118 = vmatpush.msra.mxu0 0.0
    %119 = vmatpush.msra.mxu0 0.0
    %120 = vmatpush.msra.mxu0 0.0
    %121 = vmatpush.msra.mxu0 0.0
    %122 = vmatpush.msra.mxu0 0.0
    %123 = vmatpush.msra.mxu0 0.0
    %124 = vmatpush.msra.mxu0 0.0
    %125 = vmatpush.msra.mxu0 0.0
    %126 = vmatpush.msra.mxu0 0.0
    %127 = vmatpush.msra.mxu0 0.0
    %128 = vmatpush.msra.mxu0 %v111
    %129 = vmatmul.f32.gmra.mxu0 %v104
    %v130 = vpop.f32.mrf.mxu0
    %v131 = vadd.f32 %v100, %v130
    %132 = vmatmul.f32.gmra.mxu0 %v107
    %v133 = vpop.f32.mrf.mxu0
    %v134 = vadd.f32 %v100, %v133
    %135 = vdwg.mxu0
    %v136 = vmax.f32 %v131, 0.0
    %v137 = vmax.f32 %v134, 0.0
    %v138 = vld [vmem:[%s1] sm:$0xff]
    %v139 = vld [vmem:[%s1 + $0x8] sm:$0xff]
    %v140 = vld [vmem:[%s1 + $0x10] sm:$0xff]
    %v141 = vld [vmem:[%s8] sm:$0x1f]
    %v142 = vld [vmem:[%s9] sm:$0x1]
    %v144 = vperm.slane %v142, 0
    %vm146 = vcmask 39936
    %v148 = vsel %vm146, %v138, 0
    %v151 = vsel %vm146, %v139, 0
    %v154 = vsel %vm146, %v140, 0
    %vm156 = vcmask 1044480
    %v158 = vsel %vm156, %v141, 0
    %160 = vmatpush.msra.mxu0 0.0
    %161 = vmatpush.msra.mxu0 0.0
    %162 = vmatpush.msra.mxu0 0.0
    %163 = vmatpush.msra.mxu0 0.0
    %164 = vmatpush.msra.mxu0 0.0
    %165 = vmatpush.msra.mxu0 0.0
    %166 = vmatpush.msra.mxu0 0.0
    %167 = vmatpush.msra.mxu0 0.0
    %168 = vmatpush.msra.mxu0 0.0
    %169 = vmatpush.msra.mxu0 0.0
    %170 = vmatpush.msra.mxu0 0.0
    %171 = vmatpush.msra.mxu0 0.0
    %172 = vmatpush.msra.mxu0 0.0
    %173 = vmatpush.msra.mxu0 0.0
    %174 = vmatpush.msra.mxu0 0.0
    %175 = vmatpush.msra.mxu0 %v158
    %176 = vmatmul.f32.gmra.mxu0 %v148
    %v177 = vpop.f32.mrf.mxu0
    %v178 = vadd.f32 %v144, %v177
    %179 = vmatmul.f32.gmra.mxu0 %v151
    %v180 = vpop.f32.mrf.mxu0
    %v181 = vadd.f32 %v144, %v180
    %182 = vmatmul.f32.gmra.mxu0 %v154
    %v183 = vpop.f32.mrf.mxu0
    %v184 = vadd.f32 %v144, %v183
    %185 = vdwg.mxu0
    %v186 = vmax.f32 %v178, 0.0
    %v187 = vmax.f32 %v181, 0.0
    %v188 = vmax.f32 %v184, 0.0
    %v189 = vld [vmem:[#allocation2] sm:$0xff]
    %v190 = vld [vmem:[#allocation2 + $0x8] sm:$0xff]
    %v191 = vld [vmem:[#allocation2 + $0x10] sm:$0xff]
    %v192 = vld [vmem:[#allocation2 + $0x18] sm:$0xff]
    %v193 = vld [vmem:[#allocation2 + $0x20] sm:$0xff]
    %v194 = vld [vmem:[#allocation2 + $0x28] sm:$0xff]
    %v195 = vld [vmem:[#allocation2 + $0x30] sm:$0xff]
    %v196 = vld [vmem:[#allocation2 + $0x38] sm:$0xff]
    %v197 = vld [vmem:[#allocation2 + $0x40] sm:$0xff]
    %v198 = vld [vmem:[#allocation2 + $0x48] sm:$0xff]
    %v199 = vld [vmem:[#allocation2 + $0x50] sm:$0xff]
    %v200 = vld [vmem:[#allocation2 + $0x58] sm:$0xff]
    %v201 = vld [vmem:[#allocation2 + $0x60] sm:$0xff]
    %v202 = vld [vmem:[#allocation2 + $0x68] sm:$0xff]
    %v203 = vld [vmem:[#allocation2 + $0x70] sm:$0xff]
    %v204 = vld [vmem:[#allocation2 + $0x78] sm:$0xff]
    %v205 = vld [vmem:[#allocation2 + $0x80] sm:$0xff]
    %v206 = vld [vmem:[#allocation2 + $0x88] sm:$0xff]
    %v207 = vld [vmem:[#allocation2 + $0x90] sm:$0xff]
    %v208 = vld [vmem:[#allocation2 + $0x98] sm:$0xff]
    %v209 = vld [vmem:[#allocation2 + $0xa0] sm:$0xff]
    %v210 = vld [vmem:[#allocation2 + $0xa8] sm:$0xff]
    %v211 = vld [vmem:[#allocation2 + $0xb0] sm:$0xff]
    %v212 = vld [vmem:[#allocation2 + $0xb8] sm:$0xff]
    %v213 = vld [vmem:[#allocation2 + $0xc0] sm:$0xff]
    %v214 = vld [vmem:[#allocation2 + $0xc8] sm:$0xff]
    %v215 = vld [vmem:[#allocation2 + $0xd0] sm:$0xff]
    %v216 = vld [vmem:[#allocation2 + $0xd8] sm:$0xff]
    %v217 = vld [vmem:[#allocation2 + $0xe0] sm:$0xff]
    %v218 = vld [vmem:[#allocation2 + $0xe8] sm:$0xff]
    %v219 = vld [vmem:[#allocation2 + $0xf0] sm:$0xff]
    %v220 = vld [vmem:[#allocation2 + $0xf8] sm:$0xff]
    %v221 = vld [vmem:[%s11] sm:$0x3]
    %v223 = vperm.slane %v221, 0
    %v224 = vperm.slane %v221, 1
    %227 = vmatpush.msra.mxu0 %v219
    %228 = vmatpush.msra.mxu0 %v217
    %229 = vmatpush.msra.mxu0 %v215
    %230 = vmatpush.msra.mxu0 %v213
    %231 = vmatpush.msra.mxu0 %v211
    %232 = vmatpush.msra.mxu0 %v209
    %233 = vmatpush.msra.mxu0 %v207
    %234 = vmatpush.msra.mxu0 %v205
    %235 = vmatpush.msra.mxu0 %v203
    %236 = vmatpush.msra.mxu0 %v201
    %237 = vmatpush.msra.mxu0 %v199
    %238 = vmatpush.msra.mxu0 %v197
    %239 = vmatpush.msra.mxu0 %v195
    %240 = vmatpush.msra.mxu0 %v193
    %241 = vmatpush.msra.mxu0 %v191
    %242 = vmatpush.msra.mxu0 %v189
    %243 = vmatmul.f32.gmra.mxu0 %v186
    %v244 = vpop.f32.mrf.mxu0
    %v245 = vadd.f32 %v223, %v244
    %246 = vmatmul.f32.gmra.mxu0 %v187
    %v247 = vpop.f32.mrf.mxu0
    %v248 = vadd.f32 %v223, %v247
    %249 = vmatmul.f32.gmra.mxu0 %v188
    %v250 = vpop.f32.mrf.mxu0
    %v251 = vadd.f32 %v223, %v250
    %252 = vdwg.mxu0
    %253 = vmatpush.msra.mxu0 %v220
    %254 = vmatpush.msra.mxu0 %v218
    %255 = vmatpush.msra.mxu0 %v216
    %256 = vmatpush.msra.mxu0 %v214
    %257 = vmatpush.msra.mxu0 %v212
    %258 = vmatpush.msra.mxu0 %v210
    %259 = vmatpush.msra.mxu0 %v208
    %260 = vmatpush.msra.mxu0 %v206
    %261 = vmatpush.msra.mxu0 %v204
    %262 = vmatpush.msra.mxu0 %v202
    %263 = vmatpush.msra.mxu0 %v200
    %264 = vmatpush.msra.mxu0 %v198
    %265 = vmatpush.msra.mxu0 %v196
    %266 = vmatpush.msra.mxu0 %v194
    %267 = vmatpush.msra.mxu0 %v192
    %268 = vmatpush.msra.mxu0 %v190
    %269 = vmatmul.f32.gmra.mxu0 %v186
    %v270 = vpop.f32.mrf.mxu0
    %v271 = vadd.f32 %v224, %v270
    %272 = vmatmul.f32.gmra.mxu0 %v187
    %v273 = vpop.f32.mrf.mxu0
    %v274 = vadd.f32 %v224, %v273
    %275 = vmatmul.f32.gmra.mxu0 %v188
    %v276 = vpop.f32.mrf.mxu0
    %v277 = vadd.f32 %v224, %v276
    %278 = vdwg.mxu0
    %v279 = vlaneseq
    %v280 = vshrl.u32 %v279, 7
    %v281 = vadd.s32 %v280, 8
    %v282 = vmul.u32 %v280, 16
    %v283 = vmul.u32 %v281, 16
    %v284 = vlaneseq
    %v285 = vand.u32 %v284, 127
    %v286 = vadd.s32 %v285, 128
    %vm287 = vcmp.ge.s32.totalorder %v285, %v282
    %vm288 = vcmp.ge.s32.totalorder %v286, %v282
    %vm289 = vcmp.ge.s32.totalorder %v285, %v283
    %vm290 = vcmp.ge.s32.totalorder %v286, %v283
    %v291 = vadd.s32 %v282, 16
    %v292 = vadd.s32 %v283, 16
    %vm293 = vcmp.lt.s32.totalorder %v285, %v291
    %vm294 = vcmp.lt.s32.totalorder %v286, %v291
    %vm295 = vcmp.lt.s32.totalorder %v285, %v292
    %vm296 = vcmp.lt.s32.totalorder %v286, %v292
    %vm297 = vmand %vm287, %vm293
    %vm298 = vmand %vm288, %vm294
    %vm299 = vmand %vm289, %vm295
    %vm300 = vmand %vm290, %vm296
    %v301 = vsel %vm297, 1, 0
    %v302 = vsel %vm298, 1, 0
    %v303 = vsel %vm299, 1, 0
    %v304 = vsel %vm300, 1, 0
    %v305 = vcvt.s32.f32 %v301
    %v306 = vcvt.s32.f32 %v302
    %v307 = vcvt.s32.f32 %v303
    %v308 = vcvt.s32.f32 %v304
    %v309 = vld [vmem:[%s5] sm:$0xf]
    %v310 = vld [vmem:[%s5 + $0x4] sm:$0xf]
    %v311 = vld [vmem:[%s5 + $0x8] sm:$0xf]
    %v312 = vld [vmem:[%s5 + $0xc] sm:$0xf]
    %v313 = vld [vmem:[%s5 + $0x10] sm:$0xf]
    %v314 = vld [vmem:[%s5 + $0x14] sm:$0xf]
    %v315 = vld [vmem:[%s5 + $0x18] sm:$0xf]
    %v316 = vld [vmem:[%s5 + $0x1c] sm:$0xf]
    %v317 = vld [vmem:[%s5 + $0x20] sm:$0xf]
    %v318 = vld [vmem:[%s5 + $0x24] sm:$0xf]
    %v319 = vld [vmem:[%s5 + $0x28] sm:$0xf]
    %v320 = vld [vmem:[%s5 + $0x2c] sm:$0xf]
    %v321 = vld [vmem:[%s5 + $0x30] sm:$0xf]
    %v322 = vld [vmem:[%s5 + $0x34] sm:$0xf]
    %v323 = vld [vmem:[%s5 + $0x38] sm:$0xf]
    %v324 = vld [vmem:[%s5 + $0x3c] sm:$0xf]
    %v325 = vld [vmem:[%s5 + $0x40] sm:$0xf]
    %v326 = vld [vmem:[%s5 + $0x44] sm:$0xf]
    %v327 = vld [vmem:[%s5 + $0x48] sm:$0xf]
    %v328 = vld [vmem:[%s5 + $0x4c] sm:$0xf]
    %v329 = vld [vmem:[%s5 + $0x50] sm:$0xf]
    %v330 = vld [vmem:[%s5 + $0x54] sm:$0xf]
    %v331 = vld [vmem:[%s5 + $0x58] sm:$0xf]
    %v332 = vld [vmem:[%s5 + $0x5c] sm:$0xf]
    %v333 = vld [vmem:[%s5 + $0x60] sm:$0xf]
    %v334 = vld [vmem:[%s5 + $0x64] sm:$0xf]
    %v335 = vld [vmem:[%s5 + $0x68] sm:$0xf]
    %v336 = vld [vmem:[%s5 + $0x6c] sm:$0xf]
    %v337 = vld [vmem:[%s5 + $0x70] sm:$0xf]
    %v338 = vld [vmem:[%s5 + $0x74] sm:$0xf]
    %v339 = vld [vmem:[%s5 + $0x78] sm:$0xf]
    %v340 = vld [vmem:[%s5 + $0x7c] sm:$0xf]
    %v341 = vunpack.c.l.bf16 %v309
    %v342 = vunpack.c.l.bf16 %v310
    %v343 = vunpack.c.l.bf16 %v311
    %v344 = vunpack.c.l.bf16 %v312
    %v345 = vunpack.c.l.bf16 %v313
    %v346 = vunpack.c.l.bf16 %v314
    %v347 = vunpack.c.l.bf16 %v315
    %v348 = vunpack.c.l.bf16 %v316
    %v349 = vunpack.c.l.bf16 %v317
    %v350 = vunpack.c.l.bf16 %v318
    %v351 = vunpack.c.l.bf16 %v319
    %v352 = vunpack.c.l.bf16 %v320
    %v353 = vunpack.c.l.bf16 %v321
    %v354 = vunpack.c.l.bf16 %v322
    %v355 = vunpack.c.l.bf16 %v323
    %v356 = vunpack.c.l.bf16 %v324
    %v357 = vunpack.c.l.bf16 %v325
    %v358 = vunpack.c.l.bf16 %v326
    %v359 = vunpack.c.l.bf16 %v327
    %v360 = vunpack.c.l.bf16 %v328
    %v361 = vunpack.c.l.bf16 %v329
    %v362 = vunpack.c.l.bf16 %v330
    %v363 = vunpack.c.l.bf16 %v331
    %v364 = vunpack.c.l.bf16 %v332
    %v365 = vunpack.c.l.bf16 %v333
    %v366 = vunpack.c.l.bf16 %v334
    %v367 = vunpack.c.l.bf16 %v335
    %v368 = vunpack.c.l.bf16 %v336
    %v369 = vunpack.c.l.bf16 %v337
    %v370 = vunpack.c.l.bf16 %v338
    %v371 = vunpack.c.l.bf16 %v339
    %v372 = vunpack.c.l.bf16 %v340
    %v373 = vld [vmem:[%s2] sm:$0xff]
    %v374 = vld [vmem:[%s2 + $0x8] sm:$0xff]
    %v375 = vld [vmem:[%s2 + $0x10] sm:$0xff]
    %vm376 = vcmask 97280
    %v378 = vsel %vm376, %v373, 0
    %v381 = vsel %vm376, %v374, 0
    %v384 = vsel %vm376, %v375, 0
    %v387 = vsel %vm109, %v137, 0
    %389 = vmatpush.msra.mxu0 0.0
    %390 = vmatpush.msra.mxu0 0.0
    %391 = vmatpush.msra.mxu0 0.0
    %392 = vmatpush.msra.mxu0 0.0
    %393 = vmatpush.msra.mxu0 0.0
    %394 = vmatpush.msra.mxu0 0.0
    %395 = vmatpush.msra.mxu0 0.0
    %396 = vmatpush.msra.mxu0 0.0
    %397 = vmatpush.msra.mxu0 0.0
    %398 = vmatpush.msra.mxu0 0.0
    %399 = vmatpush.msra.mxu0 0.0
    %400 = vmatpush.msra.mxu0 0.0
    %401 = vmatpush.msra.mxu0 0.0
    %402 = vmatpush.msra.mxu0 0.0
    %403 = vmatpush.msra.mxu0 %v387
    %404 = vmatpush.msra.mxu0 %v136
    %405 = vmatmul.f32.gmra.mxu0 %v378
    %v406 = vpop.f32.mrf.mxu0
    %v407 = vadd.f32 0.0, %v406
    %408 = vmatmul.f32.gmra.mxu0 %v381
    %v409 = vpop.f32.mrf.mxu0
    %v410 = vadd.f32 0.0, %v409
    %411 = vmatmul.f32.gmra.mxu0 %v384
    %v412 = vpop.f32.mrf.mxu0
    %v413 = vadd.f32 0.0, %v412
    %414 = vdwg.mxu0
    %vm415 = vcmask 130048
    %v417 = vsel %vm415, %v407, 0
    %v420 = vsel %vm415, %v410, 0
    %v423 = vsel %vm415, %v413, 0
    %425 = vmatpush.msra.mxu0 0.0
    %426 = vmatpush.msra.mxu0 0.0
    %427 = vmatpush.msra.mxu0 0.0
    %428 = vmatpush.msra.mxu0 0.0
    %429 = vmatpush.msra.mxu0 0.0
    %430 = vmatpush.msra.mxu0 0.0
    %431 = vmatpush.msra.mxu0 0.0
    %432 = vmatpush.msra.mxu0 0.0
    %433 = vmatpush.msra.mxu0 0.0
    %434 = vmatpush.msra.mxu0 0.0
    %435 = vmatpush.msra.mxu0 0.0
    %436 = vmatpush.msra.mxu0 0.0
    %437 = vmatpush.msra.mxu0 0.0
    %438 = vmatpush.msra.mxu0 0.0
    %439 = vmatpush.msra.mxu0 %v307
    %440 = vmatpush.msra.mxu0 %v305
    %441 = vmatmul.f32.gmra.mxu0 %v417
    %v442 = vpop.f32.mrf.mxu0
    %v443 = vadd.f32 0.0, %v442
    %444 = vmatmul.f32.gmra.mxu0 %v420
    %v445 = vpop.f32.mrf.mxu0
    %v446 = vadd.f32 0.0, %v445
    %447 = vmatmul.f32.gmra.mxu0 %v423
    %v448 = vpop.f32.mrf.mxu0
    %v449 = vadd.f32 0.0, %v448
    %450 = vdwg.mxu0
    %451 = vmatpush.msra.mxu0 0.0
    %452 = vmatpush.msra.mxu0 0.0
    %453 = vmatpush.msra.mxu0 0.0
    %454 = vmatpush.msra.mxu0 0.0
    %455 = vmatpush.msra.mxu0 0.0
    %456 = vmatpush.msra.mxu0 0.0
    %457 = vmatpush.msra.mxu0 0.0
    %458 = vmatpush.msra.mxu0 0.0
    %459 = vmatpush.msra.mxu0 0.0
    %460 = vmatpush.msra.mxu0 0.0
    %461 = vmatpush.msra.mxu0 0.0
    %462 = vmatpush.msra.mxu0 0.0
    %463 = vmatpush.msra.mxu0 0.0
    %464 = vmatpush.msra.mxu0 0.0
    %465 = vmatpush.msra.mxu0 %v308
    %466 = vmatpush.msra.mxu0 %v306
    %467 = vmatmul.f32.gmra.mxu0 %v417
    %v468 = vpop.f32.mrf.mxu0
    %v469 = vadd.f32 0.0, %v468
    %470 = vmatmul.f32.gmra.mxu0 %v420
    %v471 = vpop.f32.mrf.mxu0
    %v472 = vadd.f32 0.0, %v471
    %473 = vmatmul.f32.gmra.mxu0 %v423
    %v474 = vpop.f32.mrf.mxu0
    %v475 = vadd.f32 0.0, %v474
    %476 = vdwg.mxu0
    %v477 = vmul.f32 %v443, %v245
    %v478 = vmul.f32 %v469, %v271
    %v479 = vmul.f32 %v446, %v248
    %v480 = vmul.f32 %v472, %v274
    %v481 = vmul.f32 %v449, %v251
    %v482 = vmul.f32 %v475, %v277
    %483 = vmatpush.msra.mxu0 %v356
    %484 = vmatpush.msra.mxu0 %v355
    %485 = vmatpush.msra.mxu0 %v354
    %486 = vmatpush.msra.mxu0 %v353
    %487 = vmatpush.msra.mxu0 %v352
    %488 = vmatpush.msra.mxu0 %v351
    %489 = vmatpush.msra.mxu0 %v350
    %490 = vmatpush.msra.mxu0 %v349
    %491 = vmatpush.msra.mxu0 %v348
    %492 = vmatpush.msra.mxu0 %v347
    %493 = vmatpush.msra.mxu0 %v346
    %494 = vmatpush.msra.mxu0 %v345
    %495 = vmatpush.msra.mxu0 %v344
    %496 = vmatpush.msra.mxu0 %v343
    %497 = vmatpush.msra.mxu0 %v342
    %498 = vmatpush.msra.mxu0 %v341
    %499 = vmatmul.f32.gmra.mxu0 %v477
    %v500 = vpop.f32.mrf.mxu0
    %v501 = vadd.f32 0.0, %v500
    %502 = vmatmul.f32.gmra.mxu0 %v479
    %v503 = vpop.f32.mrf.mxu0
    %v504 = vadd.f32 0.0, %v503
    %505 = vmatmul.f32.gmra.mxu0 %v481
    %v506 = vpop.f32.mrf.mxu0
    %v507 = vadd.f32 0.0, %v506
    %508 = vdwg.mxu0
    %509 = vmatpush.msra.mxu0 %v372
    %510 = vmatpush.msra.mxu0 %v371
    %511 = vmatpush.msra.mxu0 %v370
    %512 = vmatpush.msra.mxu0 %v369
    %513 = vmatpush.msra.mxu0 %v368
    %514 = vmatpush.msra.mxu0 %v367
    %515 = vmatpush.msra.mxu0 %v366
    %516 = vmatpush.msra.mxu0 %v365
    %517 = vmatpush.msra.mxu0 %v364
    %518 = vmatpush.msra.mxu0 %v363
    %519 = vmatpush.msra.mxu0 %v362
    %520 = vmatpush.msra.mxu0 %v361
    %521 = vmatpush.msra.mxu0 %v360
    %522 = vmatpush.msra.mxu0 %v359
    %523 = vmatpush.msra.mxu0 %v358
    %524 = vmatpush.msra.mxu0 %v357
    %525 = vmatmul.f32.gmra.mxu0 %v478
    %v526 = vpop.f32.mrf.mxu0
    %v527 = vadd.f32 %v501, %v526
    %528 = vmatmul.f32.gmra.mxu0 %v480
    %v529 = vpop.f32.mrf.mxu0
    %v530 = vadd.f32 %v504, %v529
    %531 = vmatmul.f32.gmra.mxu0 %v482
    %v532 = vpop.f32.mrf.mxu0
    %v533 = vadd.f32 %v507, %v532
    %534 = vdwg.mxu0
    %v535 = vld [vmem:[%s3] sm:$0xff]
    %v536 = vld [vmem:[%s3 + $0x8] sm:$0xf]
    %v537 = vld [vmem:[%s12] sm:$0x1]
    %v539 = vperm.slane %v537, 0
    %vm541 = vcmask 195584
    %v543 = vsel %vm541, %v535, 0
    %v546 = vsel %vm541, %v536, 0
    %548 = vmatpush.msra.mxu0 0.0
    %549 = vmatpush.msra.mxu0 0.0
    %550 = vmatpush.msra.mxu0 0.0
    %551 = vmatpush.msra.mxu0 0.0
    %552 = vmatpush.msra.mxu0 0.0
    %553 = vmatpush.msra.mxu0 0.0
    %554 = vmatpush.msra.mxu0 0.0
    %555 = vmatpush.msra.mxu0 0.0
    %556 = vmatpush.msra.mxu0 0.0
    %557 = vmatpush.msra.mxu0 0.0
    %558 = vmatpush.msra.mxu0 0.0
    %559 = vmatpush.msra.mxu0 0.0
    %560 = vmatpush.msra.mxu0 0.0
    %561 = vmatpush.msra.mxu0 %v533
    %562 = vmatpush.msra.mxu0 %v530
    %563 = vmatpush.msra.mxu0 %v527
    %564 = vmatmul.f32.gmra.mxu0 %v543
    %v565 = vpop.f32.mrf.mxu0
    %v566 = vadd.f32 %v539, %v565
    %567 = vmatmul.f32.gmra.mxu0 %v546
    %v568 = vpop.f32.mrf.mxu0
    %v569 = vadd.f32 %v539, %v568
    %570 = vdwg.mxu0
    %v571 = vmax.f32 %v566, 0.0
    %v572 = vmax.f32 %v569, 0.0
    %s573 = sld [smem:[#allocation6]]
    %v574 = vstv %s573
    %v575 = vmul.f32 %v574, %v136
    %v576 = vmul.f32 %v574, %v137
    %s577 = sld [smem:[#allocation6 + $0x1]]
    %v578 = vstv %s577
    %v579 = vmul.f32 %v578, %v571
    %v580 = vmul.f32 %v578, %v572
    %v581 = vadd.f32 %v575, %v579
    %v582 = vadd.f32 %v576, %v580
    %s583 = sld [smem:[#allocation6 + $0x2]]
    %v584 = vstv %s583
    %v585 = vadd.f32 %v581, %v584
    %v586 = vadd.f32 %v582, %v584
    %v587 = vld [vmem:[%s13] sm:$0xff]
    %v588 = vld [vmem:[%s13 + $0x8] sm:$0xff]
    %v589 = vld [vmem:[%s15] sm:$0x1]
    %v591 = vperm.slane %v589, 0
    %v594 = vsel %vm415, %v585, 0
    %v597 = vsel %vm415, %v586, 0
    %599 = vmatpush.msra.mxu0 0.0
    %600 = vmatpush.msra.mxu0 0.0
    %601 = vmatpush.msra.mxu0 0.0
    %602 = vmatpush.msra.mxu0 0.0
    %603 = vmatpush.msra.mxu0 0.0
    %604 = vmatpush.msra.mxu0 0.0
    %605 = vmatpush.msra.mxu0 0.0
    %606 = vmatpush.msra.mxu0 0.0
    %607 = vmatpush.msra.mxu0 0.0
    %608 = vmatpush.msra.mxu0 0.0
    %609 = vmatpush.msra.mxu0 0.0
    %610 = vmatpush.msra.mxu0 0.0
    %611 = vmatpush.msra.mxu0 0.0
    %612 = vmatpush.msra.mxu0 0.0
    %613 = vmatpush.msra.mxu0 %v588
    %614 = vmatpush.msra.mxu0 %v587
    %615 = vmatmul.f32.gmra.mxu0 %v594
    %v616 = vpop.f32.mrf.mxu0
    %v617 = vadd.f32 %v591, %v616
    %618 = vmatmul.f32.gmra.mxu0 %v597
    %v619 = vpop.f32.mrf.mxu0
    %v620 = vadd.f32 %v591, %v619
    %621 = vdwg.mxu0
    %v622 = vld [vmem:[%s14] sm:$0xff]
    %v623 = vld [vmem:[%s14 + $0x8] sm:$0xff]
    %v624 = vld [vmem:[%s16] sm:$0x1]
    %v626 = vperm.slane %v624, 0
    %v629 = vsel %vm415, %v136, 0
    %v631 = vsel %vm415, %v137, 0
    %633 = vmatpush.msra.mxu0 0.0
    %634 = vmatpush.msra.mxu0 0.0
    %635 = vmatpush.msra.mxu0 0.0
    %636 = vmatpush.msra.mxu0 0.0
    %637 = vmatpush.msra.mxu0 0.0
    %638 = vmatpush.msra.mxu0 0.0
    %639 = vmatpush.msra.mxu0 0.0
    %640 = vmatpush.msra.mxu0 0.0
    %641 = vmatpush.msra.mxu0 0.0
    %642 = vmatpush.msra.mxu0 0.0
    %643 = vmatpush.msra.mxu0 0.0
    %644 = vmatpush.msra.mxu0 0.0
    %645 = vmatpush.msra.mxu0 0.0
    %646 = vmatpush.msra.mxu0 0.0
    %647 = vmatpush.msra.mxu0 %v623
    %648 = vmatpush.msra.mxu0 %v622
    %649 = vmatmul.f32.gmra.mxu0 %v629
    %v650 = vpop.f32.mrf.mxu0
    %v651 = vadd.f32 %v626, %v650
    %652 = vmatmul.f32.gmra.mxu0 %v631
    %v653 = vpop.f32.mrf.mxu0
    %v654 = vadd.f32 %v626, %v653
    %655 = vdwg.mxu0
    %v656 = vadd.f32 %v617, %v651
    %v657 = vadd.f32 %v620, %v654
    %v658 = vxor.u32 %v656, 2147483648
    %v659 = vxor.u32 %v657, 2147483648
    %v660 = vmul.f32 %v658, 1.442695
    %v661 = vpow.pop %v660
    %v662 = vmul.f32 %v659, 1.442695
    %v663 = vpow.pop %v662
    %v664 = vadd.f32 %v661, 1.0
    %v665 = vadd.f32 %v663, 1.0
    %v666 = vrcp.pop %v664
    %v667 = vmul.f32 %v664, %v666
    %v668 = vsub.f32 1.0, %v667
    %v669 = vmul.f32 %v666, %v668
    %v670 = vadd.f32 %v666, %v669
    %vm671 = vweird.f32 %v664
    %vm672 = vweird.f32 %v666
    %vm673 = vmor %vm671, %vm672
    %v674 = vsel %vm673, %v666, %v670
    %v675 = vand.u32 2147483647, %v664
    %vm676 = vcmp.eq.f32.partialorder %v675, 8.507059e+37
    %v677 = vand.u32 %v664, 2147483648
    %v678 = vor.u32 1.1754944e-38, %v677
    %v679 = vsel %vm676, %v678, %v674
    %v680 = vmul.f32 1.0, %v679
    %v681 = vrcp.pop %v665
    %v682 = vmul.f32 %v665, %v681
    %v683 = vsub.f32 1.0, %v682
    %v684 = vmul.f32 %v681, %v683
    %v685 = vadd.f32 %v681, %v684
    %vm686 = vweird.f32 %v665
    %vm687 = vweird.f32 %v681
    %vm688 = vmor %vm686, %vm687
    %v689 = vsel %vm688, %v681, %v685
    %v690 = vand.u32 2147483647, %v665
    %vm691 = vcmp.eq.f32.partialorder %v690, 8.507059e+37
    %v692 = vand.u32 %v665, 2147483648
    %v693 = vor.u32 1.1754944e-38, %v692
    %v694 = vsel %vm691, %v693, %v689
    %v695 = vmul.f32 1.0, %v694
    %698 = vrot.lane.b32.xlu0 %v651, 96
    %v699 = vpop.permute.xlu0 %698
    %700 = vrot.lane.b32.xlu0 %v654, 96
    %v701 = vpop.permute.xlu0 %700
    %v704 = vmul.f32 %v680, %v699
    %v705 = vmul.f32 %v695, %v701
    %708 = vrot.lane.b32.xlu0 %v704, 32
    %v709 = vpop.permute.xlu0 %708
    %710 = vrot.lane.b32.xlu0 %v705, 32
    %v711 = vpop.permute.xlu0 %710
    %v714 = vadd.f32 %v617, %v709
    %v715 = vadd.f32 %v620, %v711
    %v716 = vtanh.pop %v714
    %v717 = vtanh.pop %v715
    %v718 = vsub.f32 1.0, %v680
    %v719 = vsub.f32 1.0, %v695
    %722 = vrot.lane.b32.xlu0 %v716, 112
    %v723 = vpop.permute.xlu0 %722
    %724 = vrot.lane.b32.xlu0 %v717, 112
    %v725 = vpop.permute.xlu0 %724
    %v728 = vmul.f32 %v718, %v723
    %v729 = vmul.f32 %v719, %v725
    %730 = vrot.lane.b32.xlu0 %v136, 16
    %v731 = vpop.permute.xlu0 %730
    %732 = vrot.lane.b32.xlu0 %v137, 16
    %v733 = vpop.permute.xlu0 %732
    %v736 = vmul.f32 %v680, %v731
    %v737 = vmul.f32 %v695, %v733
    %v738 = vadd.f32 %v728, %v736
    %v739 = vadd.f32 %v729, %v737
    %s740 = sld [smem:[#allocation6 + $0x3]]
    %v741 = vstv %s740
    %v742 = vmul.f32 %v741, %v738
    %v743 = vmul.f32 %v741, %v739
    %v744 = vadd.f32 %v742, 0.0
    %v745 = vadd.f32 %v743, 0.0
    %748 = vrot.lane.b32.xlu0 %v738, 112
    %v749 = vpop.permute.xlu0 %748
    %750 = vrot.lane.b32.xlu0 %v739, 112
    %v751 = vpop.permute.xlu0 %750
    %v753 = vsel %vm109, %v751, 0
    %755 = vmatpush.msra.mxu0 0.0
    %756 = vmatpush.msra.mxu0 0.0
    %757 = vmatpush.msra.mxu0 0.0
    %758 = vmatpush.msra.mxu0 0.0
    %759 = vmatpush.msra.mxu0 0.0
    %760 = vmatpush.msra.mxu0 0.0
    %761 = vmatpush.msra.mxu0 0.0
    %762 = vmatpush.msra.mxu0 0.0
    %763 = vmatpush.msra.mxu0 0.0
    %764 = vmatpush.msra.mxu0 0.0
    %765 = vmatpush.msra.mxu0 0.0
    %766 = vmatpush.msra.mxu0 0.0
    %767 = vmatpush.msra.mxu0 0.0
    %768 = vmatpush.msra.mxu0 0.0
    %769 = vmatpush.msra.mxu0 %v753
    %770 = vmatpush.msra.mxu0 %v749
    %771 = vmatmul.f32.gmra.mxu0 %v378
    %v772 = vpop.f32.mrf.mxu0
    %v773 = vadd.f32 0.0, %v772
    %774 = vmatmul.f32.gmra.mxu0 %v381
    %v775 = vpop.f32.mrf.mxu0
    %v776 = vadd.f32 0.0, %v775
    %777 = vmatmul.f32.gmra.mxu0 %v384
    %v778 = vpop.f32.mrf.mxu0
    %v779 = vadd.f32 0.0, %v778
    %780 = vdwg.mxu0
    %v782 = vsel %vm415, %v773, 0
    %v785 = vsel %vm415, %v776, 0
    %v788 = vsel %vm415, %v779, 0
    %790 = vmatpush.msra.mxu0 0.0
    %791 = vmatpush.msra.mxu0 0.0
    %792 = vmatpush.msra.mxu0 0.0
    %793 = vmatpush.msra.mxu0 0.0
    %794 = vmatpush.msra.mxu0 0.0
    %795 = vmatpush.msra.mxu0 0.0
    %796 = vmatpush.msra.mxu0 0.0
    %797 = vmatpush.msra.mxu0 0.0
    %798 = vmatpush.msra.mxu0 0.0
    %799 = vmatpush.msra.mxu0 0.0
    %800 = vmatpush.msra.mxu0 0.0
    %801 = vmatpush.msra.mxu0 0.0
    %802 = vmatpush.msra.mxu0 0.0
    %803 = vmatpush.msra.mxu0 0.0
    %804 = vmatpush.msra.mxu0 %v307
    %805 = vmatpush.msra.mxu0 %v305
    %806 = vmatmul.f32.gmra.mxu0 %v782
    %v807 = vpop.f32.mrf.mxu0
    %v808 = vadd.f32 0.0, %v807
    %809 = vmatmul.f32.gmra.mxu0 %v785
    %v810 = vpop.f32.mrf.mxu0
    %v811 = vadd.f32 0.0, %v810
    %812 = vmatmul.f32.gmra.mxu0 %v788
    %v813 = vpop.f32.mrf.mxu0
    %v814 = vadd.f32 0.0, %v813
    %815 = vdwg.mxu0
    %816 = vmatpush.msra.mxu0 0.0
    %817 = vmatpush.msra.mxu0 0.0
    %818 = vmatpush.msra.mxu0 0.0
    %819 = vmatpush.msra.mxu0 0.0
    %820 = vmatpush.msra.mxu0 0.0
    %821 = vmatpush.msra.mxu0 0.0
    %822 = vmatpush.msra.mxu0 0.0
    %823 = vmatpush.msra.mxu0 0.0
    %824 = vmatpush.msra.mxu0 0.0
    %825 = vmatpush.msra.mxu0 0.0
    %826 = vmatpush.msra.mxu0 0.0
    %827 = vmatpush.msra.mxu0 0.0
    %828 = vmatpush.msra.mxu0 0.0
    %829 = vmatpush.msra.mxu0 0.0
    %830 = vmatpush.msra.mxu0 %v308
    %831 = vmatpush.msra.mxu0 %v306
    %832 = vmatmul.f32.gmra.mxu0 %v782
    %v833 = vpop.f32.mrf.mxu0
    %v834 = vadd.f32 0.0, %v833
    %835 = vmatmul.f32.gmra.mxu0 %v785
    %v836 = vpop.f32.mrf.mxu0
    %v837 = vadd.f32 0.0, %v836
    %838 = vmatmul.f32.gmra.mxu0 %v788
    %v839 = vpop.f32.mrf.mxu0
    %v840 = vadd.f32 0.0, %v839
    %841 = vdwg.mxu0
    %v842 = vmul.f32 %v808, %v245
    %v843 = vmul.f32 %v834, %v271
    %v844 = vmul.f32 %v811, %v248
    %v845 = vmul.f32 %v837, %v274
    %v846 = vmul.f32 %v814, %v251
    %v847 = vmul.f32 %v840, %v277
    %848 = vmatpush.msra.mxu0 %v356
    %849 = vmatpush.msra.mxu0 %v355
    %850 = vmatpush.msra.mxu0 %v354
    %851 = vmatpush.msra.mxu0 %v353
    %852 = vmatpush.msra.mxu0 %v352
    %853 = vmatpush.msra.mxu0 %v351
    %854 = vmatpush.msra.mxu0 %v350
    %855 = vmatpush.msra.mxu0 %v349
    %856 = vmatpush.msra.mxu0 %v348
    %857 = vmatpush.msra.mxu0 %v347
    %858 = vmatpush.msra.mxu0 %v346
    %859 = vmatpush.msra.mxu0 %v345
    %860 = vmatpush.msra.mxu0 %v344
    %861 = vmatpush.msra.mxu0 %v343
    %862 = vmatpush.msra.mxu0 %v342
    %863 = vmatpush.msra.mxu0 %v341
    %864 = vmatmul.f32.gmra.mxu0 %v842
    %v865 = vpop.f32.mrf.mxu0
    %v866 = vadd.f32 0.0, %v865
    %867 = vmatmul.f32.gmra.mxu0 %v844
    %v868 = vpop.f32.mrf.mxu0
    %v869 = vadd.f32 0.0, %v868
    %870 = vmatmul.f32.gmra.mxu0 %v846
    %v871 = vpop.f32.mrf.mxu0
    %v872 = vadd.f32 0.0, %v871
    %873 = vdwg.mxu0
    %874 = vmatpush.msra.mxu0 %v372
    %875 = vmatpush.msra.mxu0 %v371
    %876 = vmatpush.msra.mxu0 %v370
    %877 = vmatpush.msra.mxu0 %v369
    %878 = vmatpush.msra.mxu0 %v368
    %879 = vmatpush.msra.mxu0 %v367
    %880 = vmatpush.msra.mxu0 %v366
    %881 = vmatpush.msra.mxu0 %v365
    %882 = vmatpush.msra.mxu0 %v364
    %883 = vmatpush.msra.mxu0 %v363
    %884 = vmatpush.msra.mxu0 %v362
    %885 = vmatpush.msra.mxu0 %v361
    %886 = vmatpush.msra.mxu0 %v360
    %887 = vmatpush.msra.mxu0 %v359
    %888 = vmatpush.msra.mxu0 %v358
    %889 = vmatpush.msra.mxu0 %v357
    %890 = vmatmul.f32.gmra.mxu0 %v843
    %v891 = vpop.f32.mrf.mxu0
    %v892 = vadd.f32 %v866, %v891
    %893 = vmatmul.f32.gmra.mxu0 %v845
    %v894 = vpop.f32.mrf.mxu0
    %v895 = vadd.f32 %v869, %v894
    %896 = vmatmul.f32.gmra.mxu0 %v847
    %v897 = vpop.f32.mrf.mxu0
    %v898 = vadd.f32 %v872, %v897
    %899 = vdwg.mxu0
    %900 = vmatpush.msra.mxu0 0.0
    %901 = vmatpush.msra.mxu0 0.0
    %902 = vmatpush.msra.mxu0 0.0
    %903 = vmatpush.msra.mxu0 0.0
    %904 = vmatpush.msra.mxu0 0.0
    %905 = vmatpush.msra.mxu0 0.0
    %906 = vmatpush.msra.mxu0 0.0
    %907 = vmatpush.msra.mxu0 0.0
    %908 = vmatpush.msra.mxu0 0.0
    %909 = vmatpush.msra.mxu0 0.0
    %910 = vmatpush.msra.mxu0 0.0
    %911 = vmatpush.msra.mxu0 0.0
    %912 = vmatpush.msra.mxu0 0.0
    %913 = vmatpush.msra.mxu0 %v898
    %914 = vmatpush.msra.mxu0 %v895
    %915 = vmatpush.msra.mxu0 %v892
    %916 = vmatmul.f32.gmra.mxu0 %v543
    %v917 = vpop.f32.mrf.mxu0
    %v918 = vadd.f32 %v539, %v917
    %919 = vmatmul.f32.gmra.mxu0 %v546
    %v920 = vpop.f32.mrf.mxu0
    %v921 = vadd.f32 %v539, %v920
    %922 = vdwg.mxu0
    %v923 = vmax.f32 %v918, 0.0
    %v924 = vmax.f32 %v921, 0.0
    %v925 = vmul.f32 %v574, %v738
    %v926 = vmul.f32 %v574, %v739
    %v927 = vmul.f32 %v578, %v923
    %v928 = vmul.f32 %v578, %v924
    %931 = vrot.lane.b32.xlu0 %v927, 16
    %v932 = vpop.permute.xlu0 %931
    %933 = vrot.lane.b32.xlu0 %v928, 16
    %v934 = vpop.permute.xlu0 %933
    %v937 = vadd.f32 %v925, %v932
    %v938 = vadd.f32 %v926, %v934
    %v939 = vadd.f32 %v937, %v584
    %v940 = vadd.f32 %v938, %v584
    %943 = vrot.lane.b32.xlu0 %v939, 112
    %v944 = vpop.permute.xlu0 %943
    %945 = vrot.lane.b32.xlu0 %v940, 112
    %v946 = vpop.permute.xlu0 %945
    %v947 = vsel %vm415, %v944, 0
    %v949 = vsel %vm415, %v946, 0
    %951 = vmatpush.msra.mxu0 0.0
    %952 = vmatpush.msra.mxu0 0.0
    %953 = vmatpush.msra.mxu0 0.0
    %954 = vmatpush.msra.mxu0 0.0
    %955 = vmatpush.msra.mxu0 0.0
    %956 = vmatpush.msra.mxu0 0.0
    %957 = vmatpush.msra.mxu0 0.0
    %958 = vmatpush.msra.mxu0 0.0
    %959 = vmatpush.msra.mxu0 0.0
    %960 = vmatpush.msra.mxu0 0.0
    %961 = vmatpush.msra.mxu0 0.0
    %962 = vmatpush.msra.mxu0 0.0
    %963 = vmatpush.msra.mxu0 0.0
    %964 = vmatpush.msra.mxu0 0.0
    %965 = vmatpush.msra.mxu0 %v588
    %966 = vmatpush.msra.mxu0 %v587
    %967 = vmatmul.f32.gmra.mxu0 %v947
    %v968 = vpop.f32.mrf.mxu0
    %v969 = vadd.f32 %v591, %v968
    %970 = vmatmul.f32.gmra.mxu0 %v949
    %v971 = vpop.f32.mrf.mxu0
    %v972 = vadd.f32 %v591, %v971
    %973 = vdwg.mxu0
    %v974 = vsel %vm415, %v749, 0
    %v976 = vsel %vm415, %v751, 0
    %978 = vmatpush.msra.mxu0 0.0
    %979 = vmatpush.msra.mxu0 0.0
    %980 = vmatpush.msra.mxu0 0.0
    %981 = vmatpush.msra.mxu0 0.0
    %982 = vmatpush.msra.mxu0 0.0
    %983 = vmatpush.msra.mxu0 0.0
    %984 = vmatpush.msra.mxu0 0.0
    %985 = vmatpush.msra.mxu0 0.0
    %986 = vmatpush.msra.mxu0 0.0
    %987 = vmatpush.msra.mxu0 0.0
    %988 = vmatpush.msra.mxu0 0.0
    %989 = vmatpush.msra.mxu0 0.0
    %990 = vmatpush.msra.mxu0 0.0
    %991 = vmatpush.msra.mxu0 0.0
    %992 = vmatpush.msra.mxu0 %v623
    %993 = vmatpush.msra.mxu0 %v622
    %994 = vmatmul.f32.gmra.mxu0 %v974
    %v995 = vpop.f32.mrf.mxu0
    %v996 = vadd.f32 %v626, %v995
    %997 = vmatmul.f32.gmra.mxu0 %v976
    %v998 = vpop.f32.mrf.mxu0
    %v999 = vadd.f32 %v626, %v998
    %1000 = vdwg.mxu0
    %v1001 = vadd.f32 %v969, %v996
    %v1002 = vadd.f32 %v972, %v999
    %v1003 = vxor.u32 %v1001, 2147483648
    %v1004 = vxor.u32 %v1002, 2147483648
    %v1005 = vmul.f32 %v1003, 1.442695
    %v1006 = vpow.pop %v1005
    %v1007 = vmul.f32 %v1004, 1.442695
    %v1008 = vpow.pop %v1007
    %v1009 = vadd.f32 %v1006, 1.0
    %v1010 = vadd.f32 %v1008, 1.0
    %v1011 = vrcp.pop %v1009
    %v1012 = vmul.f32 %v1009, %v1011
    %v1013 = vsub.f32 1.0, %v1012
    %v1014 = vmul.f32 %v1011, %v1013
    %v1015 = vadd.f32 %v1011, %v1014
    %vm1016 = vweird.f32 %v1009
    %vm1017 = vweird.f32 %v1011
    %vm1018 = vmor %vm1016, %vm1017
    %v1019 = vsel %vm1018, %v1011, %v1015
    %v1020 = vand.u32 2147483647, %v1009
    %vm1021 = vcmp.eq.f32.partialorder %v1020, 8.507059e+37
    %v1022 = vand.u32 %v1009, 2147483648
    %v1023 = vor.u32 1.1754944e-38, %v1022
    %v1024 = vsel %vm1021, %v1023, %v1019
    %v1025 = vmul.f32 1.0, %v1024
    %v1026 = vrcp.pop %v1010
    %v1027 = vmul.f32 %v1010, %v1026
    %v1028 = vsub.f32 1.0, %v1027
    %v1029 = vmul.f32 %v1026, %v1028
    %v1030 = vadd.f32 %v1026, %v1029
    %vm1031 = vweird.f32 %v1010
    %vm1032 = vweird.f32 %v1026
    %vm1033 = vmor %vm1031, %vm1032
    %v1034 = vsel %vm1033, %v1026, %v1030
    %v1035 = vand.u32 2147483647, %v1010
    %vm1036 = vcmp.eq.f32.partialorder %v1035, 8.507059e+37
    %v1037 = vand.u32 %v1010, 2147483648
    %v1038 = vor.u32 1.1754944e-38, %v1037
    %v1039 = vsel %vm1036, %v1038, %v1034
    %v1040 = vmul.f32 1.0, %v1039
    %1043 = vrot.lane.b32.xlu0 %v996, 96
    %v1044 = vpop.permute.xlu0 %1043
    %1045 = vrot.lane.b32.xlu0 %v999, 96
    %v1046 = vpop.permute.xlu0 %1045
    %v1049 = vmul.f32 %v1025, %v1044
    %v1050 = vmul.f32 %v1040, %v1046
    %1053 = vrot.lane.b32.xlu0 %v1049, 32
    %v1054 = vpop.permute.xlu0 %1053
    %1055 = vrot.lane.b32.xlu0 %v1050, 32
    %v1056 = vpop.permute.xlu0 %1055
    %v1059 = vadd.f32 %v969, %v1054
    %v1060 = vadd.f32 %v972, %v1056
    %v1061 = vtanh.pop %v1059
    %v1062 = vtanh.pop %v1060
    %v1063 = vsub.f32 1.0, %v1025
    %v1064 = vsub.f32 1.0, %v1040
    %1067 = vrot.lane.b32.xlu0 %v1061, 112
    %v1068 = vpop.permute.xlu0 %1067
    %1069 = vrot.lane.b32.xlu0 %v1062, 112
    %v1070 = vpop.permute.xlu0 %1069
    %v1073 = vmul.f32 %v1063, %v1068
    %v1074 = vmul.f32 %v1064, %v1070
    %v1075 = vmul.f32 %v1025, %v738
    %v1076 = vmul.f32 %v1040, %v739
    %v1077 = vadd.f32 %v1073, %v1075
    %v1078 = vadd.f32 %v1074, %v1076
    %s1079 = sld [smem:[#allocation6 + $0x4]]
    %v1080 = vstv %s1079
    %v1081 = vmul.f32 %v1080, %v1077
    %v1082 = vmul.f32 %v1080, %v1078
    %v1083 = vadd.f32 %v744, %v1081
    %v1084 = vadd.f32 %v745, %v1082
    %1087 = vrot.lane.b32.xlu0 %v1077, 112
    %v1088 = vpop.permute.xlu0 %1087
    %1089 = vrot.lane.b32.xlu0 %v1078, 112
    %v1090 = vpop.permute.xlu0 %1089
    %v1092 = vsel %vm109, %v1090, 0
    %1094 = vmatpush.msra.mxu0 0.0
    %1095 = vmatpush.msra.mxu0 0.0
    %1096 = vmatpush.msra.mxu0 0.0
    %1097 = vmatpush.msra.mxu0 0.0
    %1098 = vmatpush.msra.mxu0 0.0
    %1099 = vmatpush.msra.mxu0 0.0
    %1100 = vmatpush.msra.mxu0 0.0
    %1101 = vmatpush.msra.mxu0 0.0
    %1102 = vmatpush.msra.mxu0 0.0
    %1103 = vmatpush.msra.mxu0 0.0
    %1104 = vmatpush.msra.mxu0 0.0
    %1105 = vmatpush.msra.mxu0 0.0
    %1106 = vmatpush.msra.mxu0 0.0
    %1107 = vmatpush.msra.mxu0 0.0
    %1108 = vmatpush.msra.mxu0 %v1092
    %1109 = vmatpush.msra.mxu0 %v1088
    %1110 = vmatmul.f32.gmra.mxu0 %v378
    %v1111 = vpop.f32.mrf.mxu0
    %v1112 = vadd.f32 0.0, %v1111
    %1113 = vmatmul.f32.gmra.mxu0 %v381
    %v1114 = vpop.f32.mrf.mxu0
    %v1115 = vadd.f32 0.0, %v1114
    %1116 = vmatmul.f32.gmra.mxu0 %v384
    %v1117 = vpop.f32.mrf.mxu0
    %v1118 = vadd.f32 0.0, %v1117
    %1119 = vdwg.mxu0
    %v1121 = vsel %vm415, %v1112, 0
    %v1124 = vsel %vm415, %v1115, 0
    %v1127 = vsel %vm415, %v1118, 0
    %1129 = vmatpush.msra.mxu0 0.0
    %1130 = vmatpush.msra.mxu0 0.0
    %1131 = vmatpush.msra.mxu0 0.0
    %1132 = vmatpush.msra.mxu0 0.0
    %1133 = vmatpush.msra.mxu0 0.0
    %1134 = vmatpush.msra.mxu0 0.0
    %1135 = vmatpush.msra.mxu0 0.0
    %1136 = vmatpush.msra.mxu0 0.0
    %1137 = vmatpush.msra.mxu0 0.0
    %1138 = vmatpush.msra.mxu0 0.0
    %1139 = vmatpush.msra.mxu0 0.0
    %1140 = vmatpush.msra.mxu0 0.0
    %1141 = vmatpush.msra.mxu0 0.0
    %1142 = vmatpush.msra.mxu0 0.0
    %1143 = vmatpush.msra.mxu0 %v307
    %1144 = vmatpush.msra.mxu0 %v305
    %1145 = vmatmul.f32.gmra.mxu0 %v1121
    %v1146 = vpop.f32.mrf.mxu0
    %v1147 = vadd.f32 0.0, %v1146
    %1148 = vmatmul.f32.gmra.mxu0 %v1124
    %v1149 = vpop.f32.mrf.mxu0
    %v1150 = vadd.f32 0.0, %v1149
    %1151 = vmatmul.f32.gmra.mxu0 %v1127
    %v1152 = vpop.f32.mrf.mxu0
    %v1153 = vadd.f32 0.0, %v1152
    %1154 = vdwg.mxu0
    %1155 = vmatpush.msra.mxu0 0.0
    %1156 = vmatpush.msra.mxu0 0.0
    %1157 = vmatpush.msra.mxu0 0.0
    %1158 = vmatpush.msra.mxu0 0.0
    %1159 = vmatpush.msra.mxu0 0.0
    %1160 = vmatpush.msra.mxu0 0.0
    %1161 = vmatpush.msra.mxu0 0.0
    %1162 = vmatpush.msra.mxu0 0.0
    %1163 = vmatpush.msra.mxu0 0.0
    %1164 = vmatpush.msra.mxu0 0.0
    %1165 = vmatpush.msra.mxu0 0.0
    %1166 = vmatpush.msra.mxu0 0.0
    %1167 = vmatpush.msra.mxu0 0.0
    %1168 = vmatpush.msra.mxu0 0.0
    %1169 = vmatpush.msra.mxu0 %v308
    %1170 = vmatpush.msra.mxu0 %v306
    %1171 = vmatmul.f32.gmra.mxu0 %v1121
    %v1172 = vpop.f32.mrf.mxu0
    %v1173 = vadd.f32 0.0, %v1172
    %1174 = vmatmul.f32.gmra.mxu0 %v1124
    %v1175 = vpop.f32.mrf.mxu0
    %v1176 = vadd.f32 0.0, %v1175
    %1177 = vmatmul.f32.gmra.mxu0 %v1127
    %v1178 = vpop.f32.mrf.mxu0
    %v1179 = vadd.f32 0.0, %v1178
    %1180 = vdwg.mxu0
    %v1181 = vmul.f32 %v1147, %v245
    %v1182 = vmul.f32 %v1173, %v271
    %v1183 = vmul.f32 %v1150, %v248
    %v1184 = vmul.f32 %v1176, %v274
    %v1185 = vmul.f32 %v1153, %v251
    %v1186 = vmul.f32 %v1179, %v277
    %1187 = vmatpush.msra.mxu0 %v356
    %1188 = vmatpush.msra.mxu0 %v355
    %1189 = vmatpush.msra.mxu0 %v354
    %1190 = vmatpush.msra.mxu0 %v353
    %1191 = vmatpush.msra.mxu0 %v352
    %1192 = vmatpush.msra.mxu0 %v351
    %1193 = vmatpush.msra.mxu0 %v350
    %1194 = vmatpush.msra.mxu0 %v349
    %1195 = vmatpush.msra.mxu0 %v348
    %1196 = vmatpush.msra.mxu0 %v347
    %1197 = vmatpush.msra.mxu0 %v346
    %1198 = vmatpush.msra.mxu0 %v345
    %1199 = vmatpush.msra.mxu0 %v344
    %1200 = vmatpush.msra.mxu0 %v343
    %1201 = vmatpush.msra.mxu0 %v342
    %1202 = vmatpush.msra.mxu0 %v341
    %1203 = vmatmul.f32.gmra.mxu0 %v1181
    %v1204 = vpop.f32.mrf.mxu0
    %v1205 = vadd.f32 0.0, %v1204
    %1206 = vmatmul.f32.gmra.mxu0 %v1183
    %v1207 = vpop.f32.mrf.mxu0
    %v1208 = vadd.f32 0.0, %v1207
    %1209 = vmatmul.f32.gmra.mxu0 %v1185
    %v1210 = vpop.f32.mrf.mxu0
    %v1211 = vadd.f32 0.0, %v1210
    %1212 = vdwg.mxu0
    %1213 = vmatpush.msra.mxu0 %v372
    %1214 = vmatpush.msra.mxu0 %v371
    %1215 = vmatpush.msra.mxu0 %v370
    %1216 = vmatpush.msra.mxu0 %v369
    %1217 = vmatpush.msra.mxu0 %v368
    %1218 = vmatpush.msra.mxu0 %v367
    %1219 = vmatpush.msra.mxu0 %v366
    %1220 = vmatpush.msra.mxu0 %v365
    %1221 = vmatpush.msra.mxu0 %v364
    %1222 = vmatpush.msra.mxu0 %v363
    %1223 = vmatpush.msra.mxu0 %v362
    %1224 = vmatpush.msra.mxu0 %v361
    %1225 = vmatpush.msra.mxu0 %v360
    %1226 = vmatpush.msra.mxu0 %v359
    %1227 = vmatpush.msra.mxu0 %v358
    %1228 = vmatpush.msra.mxu0 %v357
    %1229 = vmatmul.f32.gmra.mxu0 %v1182
    %v1230 = vpop.f32.mrf.mxu0
    %v1231 = vadd.f32 %v1205, %v1230
    %1232 = vmatmul.f32.gmra.mxu0 %v1184
    %v1233 = vpop.f32.mrf.mxu0
    %v1234 = vadd.f32 %v1208, %v1233
    %1235 = vmatmul.f32.gmra.mxu0 %v1186
    %v1236 = vpop.f32.mrf.mxu0
    %v1237 = vadd.f32 %v1211, %v1236
    %1238 = vdwg.mxu0
    %1239 = vmatpush.msra.mxu0 0.0
    %1240 = vmatpush.msra.mxu0 0.0
    %1241 = vmatpush.msra.mxu0 0.0
    %1242 = vmatpush.msra.mxu0 0.0
    %1243 = vmatpush.msra.mxu0 0.0
    %1244 = vmatpush.msra.mxu0 0.0
    %1245 = vmatpush.msra.mxu0 0.0
    %1246 = vmatpush.msra.mxu0 0.0
    %1247 = vmatpush.msra.mxu0 0.0
    %1248 = vmatpush.msra.mxu0 0.0
    %1249 = vmatpush.msra.mxu0 0.0
    %1250 = vmatpush.msra.mxu0 0.0
    %1251 = vmatpush.msra.mxu0 0.0
    %1252 = vmatpush.msra.mxu0 %v1237
    %1253 = vmatpush.msra.mxu0 %v1234
    %1254 = vmatpush.msra.mxu0 %v1231
    %1255 = vmatmul.f32.gmra.mxu0 %v543
    %v1256 = vpop.f32.mrf.mxu0
    %v1257 = vadd.f32 %v539, %v1256
    %1258 = vmatmul.f32.gmra.mxu0 %v546
    %v1259 = vpop.f32.mrf.mxu0
    %v1260 = vadd.f32 %v539, %v1259
    %1261 = vdwg.mxu0
    %v1262 = vmax.f32 %v1257, 0.0
    %v1263 = vmax.f32 %v1260, 0.0
    %v1264 = vmul.f32 %v574, %v1077
    %v1265 = vmul.f32 %v574, %v1078
    %v1266 = vmul.f32 %v578, %v1262
    %v1267 = vmul.f32 %v578, %v1263
    %1270 = vrot.lane.b32.xlu0 %v1266, 16
    %v1271 = vpop.permute.xlu0 %1270
    %1272 = vrot.lane.b32.xlu0 %v1267, 16
    %v1273 = vpop.permute.xlu0 %1272
    %v1276 = vadd.f32 %v1264, %v1271
    %v1277 = vadd.f32 %v1265, %v1273
    %v1278 = vadd.f32 %v1276, %v584
    %v1279 = vadd.f32 %v1277, %v584
    %1282 = vrot.lane.b32.xlu0 %v1278, 112
    %v1283 = vpop.permute.xlu0 %1282
    %1284 = vrot.lane.b32.xlu0 %v1279, 112
    %v1285 = vpop.permute.xlu0 %1284
    %v1286 = vsel %vm415, %v1283, 0
    %v1288 = vsel %vm415, %v1285, 0
    %1290 = vmatpush.msra.mxu0 0.0
    %1291 = vmatpush.msra.mxu0 0.0
    %1292 = vmatpush.msra.mxu0 0.0
    %1293 = vmatpush.msra.mxu0 0.0
    %1294 = vmatpush.msra.mxu0 0.0
    %1295 = vmatpush.msra.mxu0 0.0
    %1296 = vmatpush.msra.mxu0 0.0
    %1297 = vmatpush.msra.mxu0 0.0
    %1298 = vmatpush.msra.mxu0 0.0
    %1299 = vmatpush.msra.mxu0 0.0
    %1300 = vmatpush.msra.mxu0 0.0
    %1301 = vmatpush.msra.mxu0 0.0
    %1302 = vmatpush.msra.mxu0 0.0
    %1303 = vmatpush.msra.mxu0 0.0
    %1304 = vmatpush.msra.mxu0 %v588
    %1305 = vmatpush.msra.mxu0 %v587
    %1306 = vmatmul.f32.gmra.mxu0 %v1286
    %v1307 = vpop.f32.mrf.mxu0
    %v1308 = vadd.f32 %v591, %v1307
    %1309 = vmatmul.f32.gmra.mxu0 %v1288
    %v1310 = vpop.f32.mrf.mxu0
    %v1311 = vadd.f32 %v591, %v1310
    %1312 = vdwg.mxu0
    %v1313 = vsel %vm415, %v1088, 0
    %v1315 = vsel %vm415, %v1090, 0
    %1317 = vmatpush.msra.mxu0 0.0
    %1318 = vmatpush.msra.mxu0 0.0
    %1319 = vmatpush.msra.mxu0 0.0
    %1320 = vmatpush.msra.mxu0 0.0
    %1321 = vmatpush.msra.mxu0 0.0
    %1322 = vmatpush.msra.mxu0 0.0
    %1323 = vmatpush.msra.mxu0 0.0
    %1324 = vmatpush.msra.mxu0 0.0
    %1325 = vmatpush.msra.mxu0 0.0
    %1326 = vmatpush.msra.mxu0 0.0
    %1327 = vmatpush.msra.mxu0 0.0
    %1328 = vmatpush.msra.mxu0 0.0
    %1329 = vmatpush.msra.mxu0 0.0
    %1330 = vmatpush.msra.mxu0 0.0
    %1331 = vmatpush.msra.mxu0 %v623
    %1332 = vmatpush.msra.mxu0 %v622
    %1333 = vmatmul.f32.gmra.mxu0 %v1313
    %v1334 = vpop.f32.mrf.mxu0
    %v1335 = vadd.f32 %v626, %v1334
    %1336 = vmatmul.f32.gmra.mxu0 %v1315
    %v1337 = vpop.f32.mrf.mxu0
    %v1338 = vadd.f32 %v626, %v1337
    %1339 = vdwg.mxu0
    %v1340 = vadd.f32 %v1308, %v1335
    %v1341 = vadd.f32 %v1311, %v1338
    %v1342 = vxor.u32 %v1340, 2147483648
    %v1343 = vxor.u32 %v1341, 2147483648
    %v1344 = vmul.f32 %v1342, 1.442695
    %v1345 = vpow.pop %v1344
    %v1346 = vmul.f32 %v1343, 1.442695
    %v1347 = vpow.pop %v1346
    %v1348 = vadd.f32 %v1345, 1.0
    %v1349 = vadd.f32 %v1347, 1.0
    %v1350 = vrcp.pop %v1348
    %v1351 = vmul.f32 %v1348, %v1350
    %v1352 = vsub.f32 1.0, %v1351
    %v1353 = vmul.f32 %v1350, %v1352
    %v1354 = vadd.f32 %v1350, %v1353
    %vm1355 = vweird.f32 %v1348
    %vm1356 = vweird.f32 %v1350
    %vm1357 = vmor %vm1355, %vm1356
    %v1358 = vsel %vm1357, %v1350, %v1354
    %v1359 = vand.u32 2147483647, %v1348
    %vm1360 = vcmp.eq.f32.partialorder %v1359, 8.507059e+37
    %v1361 = vand.u32 %v1348, 2147483648
    %v1362 = vor.u32 1.1754944e-38, %v1361
    %v1363 = vsel %vm1360, %v1362, %v1358
    %v1364 = vmul.f32 1.0, %v1363
    %v1365 = vrcp.pop %v1349
    %v1366 = vmul.f32 %v1349, %v1365
    %v1367 = vsub.f32 1.0, %v1366
    %v1368 = vmul.f32 %v1365, %v1367
    %v1369 = vadd.f32 %v1365, %v1368
    %vm1370 = vweird.f32 %v1349
    %vm1371 = vweird.f32 %v1365
    %vm1372 = vmor %vm1370, %vm1371
    %v1373 = vsel %vm1372, %v1365, %v1369
    %v1374 = vand.u32 2147483647, %v1349
    %vm1375 = vcmp.eq.f32.partialorder %v1374, 8.507059e+37
    %v1376 = vand.u32 %v1349, 2147483648
    %v1377 = vor.u32 1.1754944e-38, %v1376
    %v1378 = vsel %vm1375, %v1377, %v1373
    %v1379 = vmul.f32 1.0, %v1378
    %1382 = vrot.lane.b32.xlu0 %v1335, 96
    %v1383 = vpop.permute.xlu0 %1382
    %1384 = vrot.lane.b32.xlu0 %v1338, 96
    %v1385 = vpop.permute.xlu0 %1384
    %v1388 = vmul.f32 %v1364, %v1383
    %v1389 = vmul.f32 %v1379, %v1385
    %1392 = vrot.lane.b32.xlu0 %v1388, 32
    %v1393 = vpop.permute.xlu0 %1392
    %1394 = vrot.lane.b32.xlu0 %v1389, 32
    %v1395 = vpop.permute.xlu0 %1394
    %v1398 = vadd.f32 %v1308, %v1393
    %v1399 = vadd.f32 %v1311, %v1395
    %v1400 = vtanh.pop %v1398
    %v1401 = vtanh.pop %v1399
    %v1402 = vsub.f32 1.0, %v1364
    %v1403 = vsub.f32 1.0, %v1379
    %1406 = vrot.lane.b32.xlu0 %v1400, 112
    %v1407 = vpop.permute.xlu0 %1406
    %1408 = vrot.lane.b32.xlu0 %v1401, 112
    %v1409 = vpop.permute.xlu0 %1408
    %v1412 = vmul.f32 %v1402, %v1407
    %v1413 = vmul.f32 %v1403, %v1409
    %v1414 = vmul.f32 %v1364, %v1077
    %v1415 = vmul.f32 %v1379, %v1078
    %v1416 = vadd.f32 %v1412, %v1414
    %v1417 = vadd.f32 %v1413, %v1415
    %s1418 = sld [smem:[#allocation6 + $0x5]]
    %v1419 = vstv %s1418
    %v1420 = vmul.f32 %v1419, %v1416
    %v1421 = vmul.f32 %v1419, %v1417
    %v1422 = vadd.f32 %v1083, %v1420
    %v1423 = vadd.f32 %v1084, %v1421
    %s1424 = sld [smem:[#allocation6 + $0x6]]
    %v1425 = vstv %s1424
    %v1426 = vadd.f32 %v1422, %v1425
    %v1427 = vadd.f32 %v1423, %v1425
    %vm1428 = vcmp.eq.s32.totalorder %v280, %v285
    %vm1429 = vcmp.eq.s32.totalorder %v281, %v285
    %v1430 = vsel %vm1428, 1, 0
    %v1431 = vsel %vm1429, 1, 0
    %v1432 = vcvt.s32.f32 %v1430
    %v1433 = vcvt.s32.f32 %v1431
    %1436 = vrot.lane.b32.xlu0 %v1426, 112
    %v1437 = vpop.permute.xlu0 %1436
    %1438 = vrot.lane.b32.xlu0 %v1427, 112
    %v1439 = vpop.permute.xlu0 %1438
    %v1441 = vsel %vm415, %v1432, 0
    %v1444 = vsel %vm415, %v1433, 0
    %v1446 = vsel %vm415, %v1437, 0
    %v1448 = vsel %vm415, %v1439, 0
    %1450 = vmatpush.xpose.msra.mxu0 0.0
    %1451 = vmatpush.xpose.msra.mxu0 0.0
    %1452 = vmatpush.xpose.msra.mxu0 0.0
    %1453 = vmatpush.xpose.msra.mxu0 0.0
    %1454 = vmatpush.xpose.msra.mxu0 0.0
    %1455 = vmatpush.xpose.msra.mxu0 0.0
    %1456 = vmatpush.xpose.msra.mxu0 0.0
    %1457 = vmatpush.xpose.msra.mxu0 0.0
    %1458 = vmatpush.xpose.msra.mxu0 0.0
    %1459 = vmatpush.xpose.msra.mxu0 0.0
    %1460 = vmatpush.xpose.msra.mxu0 0.0
    %1461 = vmatpush.xpose.msra.mxu0 0.0
    %1462 = vmatpush.xpose.msra.mxu0 0.0
    %1463 = vmatpush.xpose.msra.mxu0 0.0
    %1464 = vmatpush.xpose.msra.mxu0 %v1448
    %1465 = vmatpush.xpose.msra.mxu0 %v1446
    %1466 = vmatmul.f32.gmra.mxu0 %v1441
    %v1467 = vpop.f32.mrf.mxu0
    %v1468 = vadd.f32 0.0, %v1467
    %1469 = vmatmul.f32.gmra.mxu0 %v1444
    %v1470 = vpop.f32.mrf.mxu0
    %v1471 = vadd.f32 0.0, %v1470
    %1472 = vdwg.mxu0
    %v1473 = vld [vmem:[%s4] sm:$0x3]
    %v1474 = vld [vmem:[%s17] sm:$0xff]
    %v1475 = vld [vmem:[%s17 + $0x8] sm:$0xff]
    %v1476 = vld [vmem:[%s17 + $0x10] sm:$0xff]
    %v1477 = vld [vmem:[%s17 + $0x18] sm:$0xff]
    %v1478 = vld [vmem:[%s18] sm:$0x1]
    %v1480 = vperm.slane %v1478, 0
    %vm1482 = vcmask 261120
    %v1484 = vsel %vm1482, 0.0, 0
    %1486 = vmatpush.msra.mxu0 0.0
    %1487 = vmatpush.msra.mxu0 0.0
    %1488 = vmatpush.msra.mxu0 0.0
    %1489 = vmatpush.msra.mxu0 0.0
    %1490 = vmatpush.msra.mxu0 0.0
    %1491 = vmatpush.msra.mxu0 0.0
    %1492 = vmatpush.msra.mxu0 0.0
    %1493 = vmatpush.msra.mxu0 0.0
    %1494 = vmatpush.msra.mxu0 0.0
    %1495 = vmatpush.msra.mxu0 0.0
    %1496 = vmatpush.msra.mxu0 0.0
    %1497 = vmatpush.msra.mxu0 0.0
    %1498 = vmatpush.msra.mxu0 %v1477
    %1499 = vmatpush.msra.mxu0 %v1476
    %1500 = vmatpush.msra.mxu0 %v1475
    %1501 = vmatpush.msra.mxu0 %v1474
    %1502 = vmatmul.f32.gmra.mxu0 %v1484
    %v1503 = vpop.f32.mrf.mxu0
    %v1504 = vadd.f32 %v1480, %v1503
    %1505 = vdwg.mxu0
    %v1506 = vxor.u32 %v1504, 2147483648
    %v1507 = vmul.f32 %v1506, 1.442695
    %v1508 = vpow.pop %v1507
    %v1509 = vadd.f32 %v1508, 1.0
    %v1510 = vrcp.pop %v1509
    %v1511 = vmul.f32 %v1509, %v1510
    %v1512 = vsub.f32 1.0, %v1511
    %v1513 = vmul.f32 %v1510, %v1512
    %v1514 = vadd.f32 %v1510, %v1513
    %vm1515 = vweird.f32 %v1509
    %vm1516 = vweird.f32 %v1510
    %vm1517 = vmor %vm1515, %vm1516
    %v1518 = vsel %vm1517, %v1510, %v1514
    %v1519 = vand.u32 2147483647, %v1509
    %vm1520 = vcmp.eq.f32.partialorder %v1519, 8.507059e+37
    %v1521 = vand.u32 %v1509, 2147483648
    %v1522 = vor.u32 1.1754944e-38, %v1521
    %v1523 = vsel %vm1520, %v1522, %v1518
    %v1524 = vmul.f32 1.0, %v1523
    %v1525 = vtanh.pop %v1504
    %v1526 = vmul.f32 %v1524, 0.0
    %1528 = vrot.lane.b32.xlu0 %v1525, 96
    %v1529 = vpop.permute.xlu0 %1528
    %v1531 = vmul.f32 %v1524, %v1529
    %1533 = vrot.lane.b32.xlu0 %v1531, 16
    %v1534 = vpop.permute.xlu0 %1533
    %v1536 = vadd.f32 %v1526, %v1534
    %v1537 = vtanh.pop %v1536
    %1539 = vrot.lane.b32.xlu0 %v1537, 32
    %v1540 = vpop.permute.xlu0 %1539
    %v1542 = vmul.f32 %v1524, %v1540
    %1544 = vrot.lane.b32.xlu0 %v1542, 80
    %v1545 = vpop.permute.xlu0 %1544
    %v1546 = vsel %vm415, %v1545, 0
    %1548 = vmatpush.msra.mxu0 0.0
    %1549 = vmatpush.msra.mxu0 0.0
    %1550 = vmatpush.msra.mxu0 0.0
    %1551 = vmatpush.msra.mxu0 0.0
    %1552 = vmatpush.msra.mxu0 0.0
    %1553 = vmatpush.msra.mxu0 0.0
    %1554 = vmatpush.msra.mxu0 0.0
    %1555 = vmatpush.msra.mxu0 0.0
    %1556 = vmatpush.msra.mxu0 0.0
    %1557 = vmatpush.msra.mxu0 0.0
    %1558 = vmatpush.msra.mxu0 0.0
    %1559 = vmatpush.msra.mxu0 0.0
    %1560 = vmatpush.msra.mxu0 0.0
    %1561 = vmatpush.msra.mxu0 0.0
    %1562 = vmatpush.msra.mxu0 %v1471
    %1563 = vmatpush.msra.mxu0 %v1468
    %1564 = vmatmul.f32.gmra.mxu0 %v1546
    %v1565 = vpop.f32.mrf.mxu0
    %v1566 = vadd.f32 0.0, %v1565
    %1567 = vdwg.mxu0
    %vm1568 = vcmp.gt.f32.partialorder %v1473, 0.5
    %v1569 = vsel %vm1568, %v1566, -1e+30
    %vm1570 = vcmask 91136
    %v1571 = vsel %vm1570, %v1569, -inf
    %1572 = vmax.xlane.f32.xlu0 %v1571
    %v1573 = vpop.xlane.xlu0 %1572
    %v1574 = vsub.f32 %v1569, %v1573
    %v1575 = vmul.f32 %v1574, 1.442695
    %v1576 = vpow.pop %v1575
    %v1577 = vmul.f32 %v1576, %v1473
    %v1578 = vsel %vm1570, %v1577, 0.0
    %1579 = vadd.xlane.f32.xlu0 %v1578
    %v1580 = vpop.xlane.xlu0 %1579
    %v1581 = vmax.f32 %v1580, 1e-20
    %v1582 = vrcp.pop %v1581
    %v1583 = vmul.f32 %v1581, %v1582
    %v1584 = vsub.f32 1.0, %v1583
    %v1585 = vmul.f32 %v1582, %v1584
    %v1586 = vadd.f32 %v1582, %v1585
    %vm1587 = vweird.f32 %v1581
    %vm1588 = vweird.f32 %v1582
    %vm1589 = vmor %vm1587, %vm1588
    %v1590 = vsel %vm1589, %v1582, %v1586
    %v1591 = vand.u32 2147483647, %v1581
    %vm1592 = vcmp.eq.f32.partialorder %v1591, 8.507059e+37
    %v1593 = vand.u32 %v1581, 2147483648
    %v1594 = vor.u32 1.1754944e-38, %v1593
    %v1595 = vsel %vm1592, %v1594, %v1590
    %v1596 = vmul.f32 %v1577, %v1595
    %v1599 = vsel %vm376, %v1596, 0
    %v1601 = vsel %vm109, %v1439, 0
    %1603 = vmatpush.msra.mxu0 0.0
    %1604 = vmatpush.msra.mxu0 0.0
    %1605 = vmatpush.msra.mxu0 0.0
    %1606 = vmatpush.msra.mxu0 0.0
    %1607 = vmatpush.msra.mxu0 0.0
    %1608 = vmatpush.msra.mxu0 0.0
    %1609 = vmatpush.msra.mxu0 0.0
    %1610 = vmatpush.msra.mxu0 0.0
    %1611 = vmatpush.msra.mxu0 0.0
    %1612 = vmatpush.msra.mxu0 0.0
    %1613 = vmatpush.msra.mxu0 0.0
    %1614 = vmatpush.msra.mxu0 0.0
    %1615 = vmatpush.msra.mxu0 0.0
    %1616 = vmatpush.msra.mxu0 0.0
    %1617 = vmatpush.msra.mxu0 %v1601
    %1618 = vmatpush.msra.mxu0 %v1437
    %1619 = vmatmul.f32.gmra.mxu0 %v1599
    %v1620 = vpop.f32.mrf.mxu0
    %v1621 = vadd.f32 0.0, %v1620
    %1622 = vdwg.mxu0
    %1625 = vrot.lane.b32.xlu0 %v1621, 16
    %v1626 = vpop.permute.xlu0 %1625
    %v1628 = vsel %vm415, %v1545, %v1626
    %v1630 = vsel %vm1482, %v1628, 0
    %1632 = vmatpush.msra.mxu0 0.0
    %1633 = vmatpush.msra.mxu0 0.0
    %1634 = vmatpush.msra.mxu0 0.0
    %1635 = vmatpush.msra.mxu0 0.0
    %1636 = vmatpush.msra.mxu0 0.0
    %1637 = vmatpush.msra.mxu0 0.0
    %1638 = vmatpush.msra.mxu0 0.0
    %1639 = vmatpush.msra.mxu0 0.0
    %1640 = vmatpush.msra.mxu0 0.0
    %1641 = vmatpush.msra.mxu0 0.0
    %1642 = vmatpush.msra.mxu0 0.0
    %1643 = vmatpush.msra.mxu0 0.0
    %1644 = vmatpush.msra.mxu0 %v1477
    %1645 = vmatpush.msra.mxu0 %v1476
    %1646 = vmatpush.msra.mxu0 %v1475
    %1647 = vmatpush.msra.mxu0 %v1474
    %1648 = vmatmul.f32.gmra.mxu0 %v1630
    %v1649 = vpop.f32.mrf.mxu0
    %v1650 = vadd.f32 %v1480, %v1649
    %1651 = vdwg.mxu0
    %v1652 = vxor.u32 %v1650, 2147483648
    %v1653 = vmul.f32 %v1652, 1.442695
    %v1654 = vpow.pop %v1653
    %v1655 = vadd.f32 %v1654, 1.0
    %v1656 = vrcp.pop %v1655
    %v1657 = vmul.f32 %v1655, %v1656
    %v1658 = vsub.f32 1.0, %v1657
    %v1659 = vmul.f32 %v1656, %v1658
    %v1660 = vadd.f32 %v1656, %v1659
    %vm1661 = vweird.f32 %v1655
    %vm1662 = vweird.f32 %v1656
    %vm1663 = vmor %vm1661, %vm1662
    %v1664 = vsel %vm1663, %v1656, %v1660
    %v1665 = vand.u32 2147483647, %v1655
    %vm1666 = vcmp.eq.f32.partialorder %v1665, 8.507059e+37
    %v1667 = vand.u32 %v1655, 2147483648
    %v1668 = vor.u32 1.1754944e-38, %v1667
    %v1669 = vsel %vm1666, %v1668, %v1664
    %v1670 = vmul.f32 1.0, %v1669
    %v1671 = vtanh.pop %v1650
    %v1672 = vmul.f32 %v1670, %v1536
    %1674 = vrot.lane.b32.xlu0 %v1671, 96
    %v1675 = vpop.permute.xlu0 %1674
    %v1677 = vmul.f32 %v1670, %v1675
    %1679 = vrot.lane.b32.xlu0 %v1677, 16
    %v1680 = vpop.permute.xlu0 %1679
    %v1682 = vadd.f32 %v1672, %v1680
    %v1683 = vtanh.pop %v1682
    %1685 = vrot.lane.b32.xlu0 %v1683, 32
    %v1686 = vpop.permute.xlu0 %1685
    %v1688 = vmul.f32 %v1670, %v1686
    %1690 = vrot.lane.b32.xlu0 %v1688, 80
    %v1691 = vpop.permute.xlu0 %1690
    %v1692 = vsel %vm415, %v1691, 0
    %1694 = vmatpush.msra.mxu0 0.0
    %1695 = vmatpush.msra.mxu0 0.0
    %1696 = vmatpush.msra.mxu0 0.0
    %1697 = vmatpush.msra.mxu0 0.0
    %1698 = vmatpush.msra.mxu0 0.0
    %1699 = vmatpush.msra.mxu0 0.0
    %1700 = vmatpush.msra.mxu0 0.0
    %1701 = vmatpush.msra.mxu0 0.0
    %1702 = vmatpush.msra.mxu0 0.0
    %1703 = vmatpush.msra.mxu0 0.0
    %1704 = vmatpush.msra.mxu0 0.0
    %1705 = vmatpush.msra.mxu0 0.0
    %1706 = vmatpush.msra.mxu0 0.0
    %1707 = vmatpush.msra.mxu0 0.0
    %1708 = vmatpush.msra.mxu0 %v1471
    %1709 = vmatpush.msra.mxu0 %v1468
    %1710 = vmatmul.f32.gmra.mxu0 %v1692
    %v1711 = vpop.f32.mrf.mxu0
    %v1712 = vadd.f32 0.0, %v1711
    %1713 = vdwg.mxu0
    %v1714 = vsel %vm1568, %v1712, -1e+30
    %v1715 = vsel %vm1570, %v1714, -inf
    %1716 = vmax.xlane.f32.xlu0 %v1715
    %v1717 = vpop.xlane.xlu0 %1716
    %v1718 = vsub.f32 %v1714, %v1717
    %v1719 = vmul.f32 %v1718, 1.442695
    %v1720 = vpow.pop %v1719
    %v1721 = vmul.f32 %v1720, %v1473
    %v1722 = vsel %vm1570, %v1721, 0.0
    %1723 = vadd.xlane.f32.xlu0 %v1722
    %v1724 = vpop.xlane.xlu0 %1723
    %v1725 = vmax.f32 %v1724, 1e-20
    %v1726 = vrcp.pop %v1725
    %v1727 = vmul.f32 %v1725, %v1726
    %v1728 = vsub.f32 1.0, %v1727
    %v1729 = vmul.f32 %v1726, %v1728
    %v1730 = vadd.f32 %v1726, %v1729
    %vm1731 = vweird.f32 %v1725
    %vm1732 = vweird.f32 %v1726
    %vm1733 = vmor %vm1731, %vm1732
    %v1734 = vsel %vm1733, %v1726, %v1730
    %v1735 = vand.u32 2147483647, %v1725
    %vm1736 = vcmp.eq.f32.partialorder %v1735, 8.507059e+37
    %v1737 = vand.u32 %v1725, 2147483648
    %v1738 = vor.u32 1.1754944e-38, %v1737
    %v1739 = vsel %vm1736, %v1738, %v1734
    %v1740 = vmul.f32 %v1721, %v1739
    %v1742 = vsel %vm376, %v1740, 0
    %1744 = vmatpush.msra.mxu0 0.0
    %1745 = vmatpush.msra.mxu0 0.0
    %1746 = vmatpush.msra.mxu0 0.0
    %1747 = vmatpush.msra.mxu0 0.0
    %1748 = vmatpush.msra.mxu0 0.0
    %1749 = vmatpush.msra.mxu0 0.0
    %1750 = vmatpush.msra.mxu0 0.0
    %1751 = vmatpush.msra.mxu0 0.0
    %1752 = vmatpush.msra.mxu0 0.0
    %1753 = vmatpush.msra.mxu0 0.0
    %1754 = vmatpush.msra.mxu0 0.0
    %1755 = vmatpush.msra.mxu0 0.0
    %1756 = vmatpush.msra.mxu0 0.0
    %1757 = vmatpush.msra.mxu0 0.0
    %1758 = vmatpush.msra.mxu0 %v1601
    %1759 = vmatpush.msra.mxu0 %v1437
    %1760 = vmatmul.f32.gmra.mxu0 %v1742
    %v1761 = vpop.f32.mrf.mxu0
    %v1762 = vadd.f32 0.0, %v1761
    %1763 = vdwg.mxu0
    %1766 = vrot.lane.b32.xlu0 %v1762, 16
    %v1767 = vpop.permute.xlu0 %1766
    %v1769 = vsel %vm415, %v1691, %v1767
    %v1771 = vsel %vm1482, %v1769, 0
    %1773 = vmatpush.msra.mxu0 0.0
    %1774 = vmatpush.msra.mxu0 0.0
    %1775 = vmatpush.msra.mxu0 0.0
    %1776 = vmatpush.msra.mxu0 0.0
    %1777 = vmatpush.msra.mxu0 0.0
    %1778 = vmatpush.msra.mxu0 0.0
    %1779 = vmatpush.msra.mxu0 0.0
    %1780 = vmatpush.msra.mxu0 0.0
    %1781 = vmatpush.msra.mxu0 0.0
    %1782 = vmatpush.msra.mxu0 0.0
    %1783 = vmatpush.msra.mxu0 0.0
    %1784 = vmatpush.msra.mxu0 0.0
    %1785 = vmatpush.msra.mxu0 %v1477
    %1786 = vmatpush.msra.mxu0 %v1476
    %1787 = vmatpush.msra.mxu0 %v1475
    %1788 = vmatpush.msra.mxu0 %v1474
    %1789 = vmatmul.f32.gmra.mxu0 %v1771
    %v1790 = vpop.f32.mrf.mxu0
    %v1791 = vadd.f32 %v1480, %v1790
    %1792 = vdwg.mxu0
    %v1793 = vxor.u32 %v1791, 2147483648
    %v1794 = vmul.f32 %v1793, 1.442695
    %v1795 = vpow.pop %v1794
    %v1796 = vadd.f32 %v1795, 1.0
    %v1797 = vrcp.pop %v1796
    %v1798 = vmul.f32 %v1796, %v1797
    %v1799 = vsub.f32 1.0, %v1798
    %v1800 = vmul.f32 %v1797, %v1799
    %v1801 = vadd.f32 %v1797, %v1800
    %vm1802 = vweird.f32 %v1796
    %vm1803 = vweird.f32 %v1797
    %vm1804 = vmor %vm1802, %vm1803
    %v1805 = vsel %vm1804, %v1797, %v1801
    %v1806 = vand.u32 2147483647, %v1796
    %vm1807 = vcmp.eq.f32.partialorder %v1806, 8.507059e+37
    %v1808 = vand.u32 %v1796, 2147483648
    %v1809 = vor.u32 1.1754944e-38, %v1808
    %v1810 = vsel %vm1807, %v1809, %v1805
    %v1811 = vmul.f32 1.0, %v1810
    %v1812 = vtanh.pop %v1791
    %v1813 = vmul.f32 %v1811, %v1682
    %1815 = vrot.lane.b32.xlu0 %v1812, 96
    %v1816 = vpop.permute.xlu0 %1815
    %v1818 = vmul.f32 %v1811, %v1816
    %1820 = vrot.lane.b32.xlu0 %v1818, 16
    %v1821 = vpop.permute.xlu0 %1820
    %v1823 = vadd.f32 %v1813, %v1821
    %v1824 = vtanh.pop %v1823
    %1826 = vrot.lane.b32.xlu0 %v1824, 32
    %v1827 = vpop.permute.xlu0 %1826
    %v1829 = vmul.f32 %v1811, %v1827
    %1831 = vrot.lane.b32.xlu0 %v1829, 80
    %v1832 = vpop.permute.xlu0 %1831
    %v1833 = vsel %vm415, %v1832, 0
    %1835 = vmatpush.msra.mxu0 0.0
    %1836 = vmatpush.msra.mxu0 0.0
    %1837 = vmatpush.msra.mxu0 0.0
    %1838 = vmatpush.msra.mxu0 0.0
    %1839 = vmatpush.msra.mxu0 0.0
    %1840 = vmatpush.msra.mxu0 0.0
    %1841 = vmatpush.msra.mxu0 0.0
    %1842 = vmatpush.msra.mxu0 0.0
    %1843 = vmatpush.msra.mxu0 0.0
    %1844 = vmatpush.msra.mxu0 0.0
    %1845 = vmatpush.msra.mxu0 0.0
    %1846 = vmatpush.msra.mxu0 0.0
    %1847 = vmatpush.msra.mxu0 0.0
    %1848 = vmatpush.msra.mxu0 0.0
    %1849 = vmatpush.msra.mxu0 %v1471
    %1850 = vmatpush.msra.mxu0 %v1468
    %1851 = vmatmul.f32.gmra.mxu0 %v1833
    %v1852 = vpop.f32.mrf.mxu0
    %v1853 = vadd.f32 0.0, %v1852
    %1854 = vdwg.mxu0
    %v1855 = vsel %vm1568, %v1853, -1e+30
    %v1856 = vsel %vm1570, %v1855, -inf
    %1857 = vmax.xlane.f32.xlu0 %v1856
    %v1858 = vpop.xlane.xlu0 %1857
    %v1859 = vsub.f32 %v1855, %v1858
    %v1860 = vmul.f32 %v1859, 1.442695
    %v1861 = vpow.pop %v1860
    %v1862 = vmul.f32 %v1861, %v1473
    %v1863 = vsel %vm1570, %v1862, 0.0
    %1864 = vadd.xlane.f32.xlu0 %v1863
    %v1865 = vpop.xlane.xlu0 %1864
    %v1866 = vmax.f32 %v1865, 1e-20
    %v1867 = vrcp.pop %v1866
    %v1868 = vmul.f32 %v1866, %v1867
    %v1869 = vsub.f32 1.0, %v1868
    %v1870 = vmul.f32 %v1867, %v1869
    %v1871 = vadd.f32 %v1867, %v1870
    %vm1872 = vweird.f32 %v1866
    %vm1873 = vweird.f32 %v1867
    %vm1874 = vmor %vm1872, %vm1873
    %v1875 = vsel %vm1874, %v1867, %v1871
    %v1876 = vand.u32 2147483647, %v1866
    %vm1877 = vcmp.eq.f32.partialorder %v1876, 8.507059e+37
    %v1878 = vand.u32 %v1866, 2147483648
    %v1879 = vor.u32 1.1754944e-38, %v1878
    %v1880 = vsel %vm1877, %v1879, %v1875
    %v1881 = vmul.f32 %v1862, %v1880
    %v1883 = vsel %vm376, %v1881, 0
    %1885 = vmatpush.msra.mxu0 0.0
    %1886 = vmatpush.msra.mxu0 0.0
    %1887 = vmatpush.msra.mxu0 0.0
    %1888 = vmatpush.msra.mxu0 0.0
    %1889 = vmatpush.msra.mxu0 0.0
    %1890 = vmatpush.msra.mxu0 0.0
    %1891 = vmatpush.msra.mxu0 0.0
    %1892 = vmatpush.msra.mxu0 0.0
    %1893 = vmatpush.msra.mxu0 0.0
    %1894 = vmatpush.msra.mxu0 0.0
    %1895 = vmatpush.msra.mxu0 0.0
    %1896 = vmatpush.msra.mxu0 0.0
    %1897 = vmatpush.msra.mxu0 0.0
    %1898 = vmatpush.msra.mxu0 0.0
    %1899 = vmatpush.msra.mxu0 %v1601
    %1900 = vmatpush.msra.mxu0 %v1437
    %1901 = vmatmul.f32.gmra.mxu0 %v1883
    %v1902 = vpop.f32.mrf.mxu0
    %v1903 = vadd.f32 0.0, %v1902
    %1904 = vdwg.mxu0
    %1907 = vrot.lane.b32.xlu0 %v1903, 16
    %v1908 = vpop.permute.xlu0 %1907
    %v1910 = vsel %vm415, %v1832, %v1908
    %vm1911 = vcmask 254976
    %1912 = vst.msk [vmem:[#allocation7] sm:$0x3] %vm1911, %v1910
    // Predicated region
    $region90: #{tpu_custom_call.1} parent=1 // pred_check
      _
    $region91: #{tpu_custom_call.1} parent=1 // pred_check_branch
      %1914 = sbr.rel (0) target = $region93
    $region92: #{tpu_custom_call.1} parent=1 // pred_region
      %1916 = vsyncadd [#allocation4], 0
      %s1918 = sshll.u32 [#allocation7], 4
      %s1919 = int_to_ptr.vmem [resolvable:$true] %s1918
      %s1920 = sshll.u32 %s20, 4
      %s1921 = int_to_ptr.hbm [resolvable:$true] %s1920
      %1923 = dma.vmem_to_hbm [thread:$0]  %s1919, 32, %s1921, [#allocation4]
    $region93: #{tpu_custom_call.1} parent=1 // pred_fallthru
      _
    // Predicated region
    $region94: #{tpu_custom_call.1} parent=1 // pred_check
      _
    $region95: #{tpu_custom_call.1} parent=1 // pred_check_branch
      %1925 = sbr.rel (0) target = $region97
    $region96: #{tpu_custom_call.1} parent=1 // pred_region
      %1927 = dma.done [#allocation4], 32
    $region97: #{tpu_custom_call.1} parent=1 // pred_fallthru
      _
    %1928 = vsyncpa [#allocation3], 1
    %1929 = vsyncpa [#allocation4], 1
    %1930 = vsyncpa [#allocation5], 1

</llo_original>
